<compile_context>
chip_gen: v5e
topology: v5e:2x2
jax: 0.10.0
libtpu: 0.0.40
codegen_flags: <defaults>
</compile_context>

<pallas_src>
import math

import jax
import jax.numpy as jnp
from jax.experimental import pallas as pl
from jax.experimental.pallas import tpu as pltpu

# ----------------------------- config (synthetic mini-BERT) -----------------------------
VOCAB = 100
MAX_POS = 64           # pos_emb sized 64; valid for S <= 64 (S=8 here)
HIDDEN = 32
NUM_HEADS = 4
HEAD_DIM = HIDDEN // NUM_HEADS
INTERMEDIATE = 64
NUM_LAYERS = 2
NUM_CLASSES = 2
CLS_PAD = 128          # classifier output lane-padded to a full 128-lane vreg (unmasked stores)
BERT_LN_EPS = 1e-12    # BERT internal LayerNorm eps
HEAD_LN_EPS = 1e-5     # nn.LayerNorm default eps (detector head)


# ----------------------------------- fused kernel ----------------------------------------
def _fused_bert_kernel(x_ref, mask_ref, eg_ref, eb_ref,
                       wqkv_ref, bqkv_ref, wo_ref, bo_ref,
                       ln1g_ref, ln1b_ref, w1_ref, b1_ref, w2_ref, b2_ref,
                       ln2g_ref, ln2b_ref, hg_ref, hb_ref, cw_ref, cb_ref,
                       o_ref):
    """One grid step == one batch element; the entire forward runs out of VMEM/vregs."""
    H, NH, Dh = HIDDEN, NUM_HEADS, HEAD_DIM
    S = x_ref.shape[1]

    def layernorm(x, g, b, eps):
        mu = jnp.mean(x, axis=-1, keepdims=True)
        var = jnp.mean(jnp.square(x - mu), axis=-1, keepdims=True)
        return (x - mu) * jax.lax.rsqrt(var + eps) * g + b

    x = x_ref[0].astype(jnp.float32)                         # (S, H) embeddings
    h = layernorm(x, eg_ref[...], eb_ref[...], BERT_LN_EPS)
    add_mask = mask_ref[0].astype(jnp.float32)               # (1, S) additive key mask

    scale = 1.0 / math.sqrt(Dh)
    gelu_c = math.sqrt(2.0 / math.pi)

    for l in range(NUM_LAYERS):                              # static unroll over layers
        # --- multi-head self-attention: packed QKV, heads unrolled, out-proj folded ---
        qkv = jnp.dot(h, wqkv_ref[l], preferred_element_type=jnp.float32) + bqkv_ref[l]  # (S, 3H)
        wo = wo_ref[l]                                       # (H, H)
        attn_out = jnp.zeros((S, H), jnp.float32)
        for hd in range(NH):
            qh = qkv[:, hd * Dh:(hd + 1) * Dh]               # (S, Dh)
            kh = qkv[:, H + hd * Dh:H + (hd + 1) * Dh]
            vh = qkv[:, 2 * H + hd * Dh:2 * H + (hd + 1) * Dh]
            # QK^T via dot_general contraction (no transpose materialized)
            s = jax.lax.dot_general(qh, kh, (((1,), (1,)), ((), ())),
                                    preferred_element_type=jnp.float32) * scale
            s = s + add_mask                                 # broadcast over query rows
            s = s - jnp.max(s, axis=-1, keepdims=True)
            p = jnp.exp(s)
            p = p * pl.reciprocal(jnp.sum(p, axis=-1, keepdims=True), approx=True)
            ctx = jnp.dot(p, vh, preferred_element_type=jnp.float32)            # (S, Dh)
            # attn @ Wo == sum_h ctx_h @ Wo[h*Dh:(h+1)*Dh, :]  -> no concat / merge_heads
            attn_out = attn_out + jnp.dot(ctx, wo[hd * Dh:(hd + 1) * Dh, :],
                                          preferred_element_type=jnp.float32)
        attn_out = attn_out + bo_ref[l]
        h = layernorm(h + attn_out, ln1g_ref[l], ln1b_ref[l], BERT_LN_EPS)       # residual folded

        # --- feed-forward (tanh-GELU) ---
        ff = jnp.dot(h, w1_ref[l], preferred_element_type=jnp.float32) + b1_ref[l]
        ff = 0.5 * ff * (1.0 + jnp.tanh(gelu_c * (ff + 0.044715 * ff * ff * ff)))
        ff = jnp.dot(ff, w2_ref[l], preferred_element_type=jnp.float32) + b2_ref[l]
        h = layernorm(h + ff, ln2g_ref[l], ln2b_ref[l], BERT_LN_EPS)             # residual folded

    # --- detector head: dropout (identity at eval) -> LayerNorm(1e-5) -> Linear(H, 128-padded) ---
    y = layernorm(h, hg_ref[...], hb_ref[...], HEAD_LN_EPS)
    o_ref[0] = (jnp.dot(y, cw_ref[...], preferred_element_type=jnp.float32)
                + cb_ref[...]).astype(o_ref.dtype)


# ----------------------------------- parameters ------------------------------------------
def init_params(key):
    def nrm(k, shape, scale=0.02):
        return scale * jax.random.normal(k, shape, jnp.float32)

    L, H, I, C = NUM_LAYERS, HIDDEN, INTERMEDIATE, NUM_CLASSES
    keys = iter(jax.random.split(key, 16))
    cls_w = nrm(next(keys), (H, C))
    return {
        "word_emb": nrm(next(keys), (VOCAB, H)),
        "pos_emb": nrm(next(keys), (MAX_POS, H)),
        "type_emb": nrm(next(keys), (2, H)),
        "emb_ln_g": jnp.ones((1, H), jnp.float32),
        "emb_ln_b": jnp.zeros((1, H), jnp.float32),
        # per-layer weights stacked on a leading layer axis; QKV packed to (H, 3H)
        "wqkv": nrm(next(keys), (L, H, 3 * H)),
        "bqkv": jnp.zeros((L, 1, 3 * H), jnp.float32),
        "wo": nrm(next(keys), (L, H, H)),
        "bo": jnp.zeros((L, 1, H), jnp.float32),
        "ln1_g": jnp.ones((L, 1, H), jnp.float32),
        "ln1_b": jnp.zeros((L, 1, H), jnp.float32),
        "w1": nrm(next(keys), (L, H, I)),
        "b1": jnp.zeros((L, 1, I), jnp.float32),
        "w2": nrm(next(keys), (L, I, H)),
        "b2": jnp.zeros((L, 1, H), jnp.float32),
        "ln2_g": jnp.ones((L, 1, H), jnp.float32),
        "ln2_b": jnp.zeros((L, 1, H), jnp.float32),
        "head_ln_g": jnp.ones((1, H), jnp.float32),
        "head_ln_b": jnp.zeros((1, H), jnp.float32),
        # classifier zero-padded to 128 output lanes (lane-dense, unmasked stores)
        "cls_w_pad": jnp.zeros((H, CLS_PAD), jnp.float32).at[:, :C].set(cls_w),
        "cls_b_pad": jnp.zeros((1, CLS_PAD), jnp.float32),
    }


# ----------------------------------- forward ---------------------------------------------
def char_level_detector_forward(params, input_ids, attention_mask):
    B, S = input_ids.shape
    H, I, L, CPAD = HIDDEN, INTERMEDIATE, NUM_LAYERS, CLS_PAD

    # embedding gathers are glue; done in plain JAX
    emb = (params["word_emb"][input_ids]
           + params["pos_emb"][jnp.arange(S)][None, :, :]
           + params["type_emb"][0][None, None, :]).astype(jnp.float32)            # (B, S, H)
    add_mask = ((1.0 - attention_mask.astype(jnp.float32)) * -1e9)[:, None, :]    # (B, 1, S)

    def bcast(shape):
        # whole-array block with constant index_map: DMA'd once, revisited across grid steps
        return pl.BlockSpec(shape, lambda b: (0,) * len(shape))

    logits_pad = pl.pallas_call(
        _fused_bert_kernel,
        out_shape=jax.ShapeDtypeStruct((B, S, CPAD), jnp.float32),
        grid=(B,),
        in_specs=[
            pl.BlockSpec((1, S, H), lambda b: (b, 0, 0)),      # embeddings (per batch element)
            pl.BlockSpec((1, 1, S), lambda b: (b, 0, 0)),      # additive attention mask
            bcast((1, H)), bcast((1, H)),                      # embedding LN
            bcast((L, H, 3 * H)), bcast((L, 1, 3 * H)),        # packed QKV
            bcast((L, H, H)), bcast((L, 1, H)),                # attention out-proj
            bcast((L, 1, H)), bcast((L, 1, H)),                # LN1
            bcast((L, H, I)), bcast((L, 1, I)),                # FFN up
            bcast((L, I, H)), bcast((L, 1, H)),                # FFN down
            bcast((L, 1, H)), bcast((L, 1, H)),                # LN2
            bcast((1, H)), bcast((1, H)),                      # head LN
            bcast((H, CPAD)), bcast((1, CPAD)),                # classifier (lane-padded)
        ],
        out_specs=pl.BlockSpec((1, S, CPAD), lambda b: (b, 0, 0)),
        compiler_params=pltpu.CompilerParams(dimension_semantics=("parallel",)),
    )(emb, add_mask,
      params["emb_ln_g"], params["emb_ln_b"],
      params["wqkv"], params["bqkv"], params["wo"], params["bo"],
      params["ln1_g"], params["ln1_b"],
      params["w1"], params["b1"], params["w2"], params["b2"],
      params["ln2_g"], params["ln2_b"],
      params["head_ln_g"], params["head_ln_b"],
      params["cls_w_pad"], params["cls_b_pad"])
    return logits_pad[:, :, :NUM_CLASSES]


# ----------------------------------- reference (pure JAX) --------------------------------
def reference_forward(params, input_ids, attention_mask):
    B, S = input_ids.shape
    H, NH, Dh = HIDDEN, NUM_HEADS, HEAD_DIM

    def ln(x, g, b, eps):
        mu = jnp.mean(x, axis=-1, keepdims=True)
        var = jnp.mean(jnp.square(x - mu), axis=-1, keepdims=True)
        return (x - mu) * jax.lax.rsqrt(var + eps) * g + b

    emb = (params["word_emb"][input_ids]
           + params["pos_emb"][jnp.arange(S)][None, :, :]
           + params["type_emb"][0][None, None, :])
    h = ln(emb, params["emb_ln_g"][0], params["emb_ln_b"][0], BERT_LN_EPS)
    mask = ((1.0 - attention_mask.astype(jnp.float32)) * -1e9)[:, None, None, :]
    gelu_c = math.sqrt(2.0 / math.pi)
    for l in range(NUM_LAYERS):
        qkv = h @ params["wqkv"][l] + params["bqkv"][l]
        q, k, v = qkv[..., :H], qkv[..., H:2 * H], qkv[..., 2 * H:]
        split = lambda t: t.reshape(B, S, NH, Dh).transpose(0, 2, 1, 3)
        s = jnp.einsum("bhqd,bhkd->bhqk", split(q), split(k)) / math.sqrt(Dh) + mask
        p = jax.nn.softmax(s, axis=-1)
        ctx = jnp.einsum("bhqk,bhkd->bhqd", p, split(v)).transpose(0, 2, 1, 3).reshape(B, S, H)
        attn_out = ctx @ params["wo"][l] + params["bo"][l]
        h = ln(h + attn_out, params["ln1_g"][l][0], params["ln1_b"][l][0], BERT_LN_EPS)
        ff = h @ params["w1"][l] + params["b1"][l]
        ff = 0.5 * ff * (1.0 + jnp.tanh(gelu_c * (ff + 0.044715 * ff ** 3)))
        ff = ff @ params["w2"][l] + params["b2"][l]
        h = ln(h + ff, params["ln2_g"][l][0], params["ln2_b"][l][0], BERT_LN_EPS)
    y = ln(h, params["head_ln_g"][0], params["head_ln_b"][0], HEAD_LN_EPS)
    return y @ params["cls_w_pad"][:, :NUM_CLASSES] + params["cls_b_pad"][0, :NUM_CLASSES]


if __name__ == "__main__":
    key = jax.random.PRNGKey(0)
    pkey, ikey = jax.random.split(key)
    params = init_params(pkey)

    B, S = 2, 8
    input_ids = jax.random.randint(ikey, (B, S), 0, VOCAB, dtype=jnp.int32)
    attention_mask = jnp.array([[1] * 8, [1] * 6 + [0] * 2], dtype=jnp.int32)

    logits = char_level_detector_forward(params, input_ids, attention_mask)
    jax.block_until_ready(logits)
    assert logits.shape == (B, S, NUM_CLASSES) and logits.dtype == jnp.float32

    # numerical sanity check vs. pure JAX (loose tolerance: approx reciprocal in-kernel and
    # default TPU matmul precision may differ slightly between the two paths)
    ref = reference_forward(params, input_ids, attention_mask)
    err = float(jnp.max(jnp.abs(logits - ref)))
    assert err < 5e-2, f"kernel vs reference mismatch: max abs err {err}"

    # TODO(synk): pretrained 'bert-base-chinese' weights are not reproducible in-script;
    # the encoder here is a deterministically-initialized structural stand-in.
    print("KERNEL_OK")
</pallas_src>

<mosaic_0001>
module attributes {stable_mosaic.version = 11 : i64} {
  func.func @_fused_bert_kernel(%arg0: i32, %arg1: memref<1x8x32xf32, #tpu.memory_space<vmem>>, %arg2: memref<1x1x8xf32, #tpu.memory_space<vmem>>, %arg3: memref<1x32xf32, #tpu.memory_space<vmem>>, %arg4: memref<1x32xf32, #tpu.memory_space<vmem>>, %arg5: memref<2x32x96xf32, #tpu.memory_space<vmem>>, %arg6: memref<2x1x96xf32, #tpu.memory_space<vmem>>, %arg7: memref<2x32x32xf32, #tpu.memory_space<vmem>>, %arg8: memref<2x1x32xf32, #tpu.memory_space<vmem>>, %arg9: memref<2x1x32xf32, #tpu.memory_space<vmem>>, %arg10: memref<2x1x32xf32, #tpu.memory_space<vmem>>, %arg11: memref<2x32x64xf32, #tpu.memory_space<vmem>>, %arg12: memref<2x1x64xf32, #tpu.memory_space<vmem>>, %arg13: memref<2x64x32xf32, #tpu.memory_space<vmem>>, %arg14: memref<2x1x32xf32, #tpu.memory_space<vmem>>, %arg15: memref<2x1x32xf32, #tpu.memory_space<vmem>>, %arg16: memref<2x1x32xf32, #tpu.memory_space<vmem>>, %arg17: memref<1x32xf32, #tpu.memory_space<vmem>>, %arg18: memref<1x32xf32, #tpu.memory_space<vmem>>, %arg19: memref<32x128xf32, #tpu.memory_space<vmem>>, %arg20: memref<1x128xf32, #tpu.memory_space<vmem>>, %arg21: memref<1x8x128xf32, #tpu.memory_space<vmem>>) attributes {dimension_semantics = [#tpu.dimension_semantics<parallel>], iteration_bounds = array<i64: 2>, scalar_prefetch = 0 : i64, scratch_operands = 0 : i64, tpu.core_type = #tpu.core_type<tc>, window_params = [{transform_indices = @transform_0, window_bounds = array<i64: 1, 8, 32>}, {transform_indices = @transform_1, window_bounds = array<i64: 1, 1, 8>}, {pipeline_mode = #tpu.pipeline_mode<synchronous>, transform_indices = @transform_2, window_bounds = array<i64: 1, 32>}, {pipeline_mode = #tpu.pipeline_mode<synchronous>, transform_indices = @transform_3, window_bounds = array<i64: 1, 32>}, {pipeline_mode = #tpu.pipeline_mode<synchronous>, transform_indices = @transform_4, window_bounds = array<i64: 2, 32, 96>}, {pipeline_mode = #tpu.pipeline_mode<synchronous>, transform_indices = @transform_5, window_bounds = array<i64: 2, 1, 96>}, {pipeline_mode = #tpu.pipeline_mode<synchronous>, transform_indices = @transform_6, window_bounds = array<i64: 2, 32, 32>}, {pipeline_mode = #tpu.pipeline_mode<synchronous>, transform_indices = @transform_7, window_bounds = array<i64: 2, 1, 32>}, {pipeline_mode = #tpu.pipeline_mode<synchronous>, transform_indices = @transform_8, window_bounds = array<i64: 2, 1, 32>}, {pipeline_mode = #tpu.pipeline_mode<synchronous>, transform_indices = @transform_9, window_bounds = array<i64: 2, 1, 32>}, {pipeline_mode = #tpu.pipeline_mode<synchronous>, transform_indices = @transform_10, window_bounds = array<i64: 2, 32, 64>}, {pipeline_mode = #tpu.pipeline_mode<synchronous>, transform_indices = @transform_11, window_bounds = array<i64: 2, 1, 64>}, {pipeline_mode = #tpu.pipeline_mode<synchronous>, transform_indices = @transform_12, window_bounds = array<i64: 2, 64, 32>}, {pipeline_mode = #tpu.pipeline_mode<synchronous>, transform_indices = @transform_13, window_bounds = array<i64: 2, 1, 32>}, {pipeline_mode = #tpu.pipeline_mode<synchronous>, transform_indices = @transform_14, window_bounds = array<i64: 2, 1, 32>}, {pipeline_mode = #tpu.pipeline_mode<synchronous>, transform_indices = @transform_15, window_bounds = array<i64: 2, 1, 32>}, {pipeline_mode = #tpu.pipeline_mode<synchronous>, transform_indices = @transform_16, window_bounds = array<i64: 1, 32>}, {pipeline_mode = #tpu.pipeline_mode<synchronous>, transform_indices = @transform_17, window_bounds = array<i64: 1, 32>}, {pipeline_mode = #tpu.pipeline_mode<synchronous>, transform_indices = @transform_18, window_bounds = array<i64: 32, 128>}, {pipeline_mode = #tpu.pipeline_mode<synchronous>, transform_indices = @transform_19, window_bounds = array<i64: 1, 128>}, {transform_indices = @transform_20, window_bounds = array<i64: 1, 8, 128>}]} {
    %c0 = arith.constant 0 : index
    %c0_0 = arith.constant 0 : index
    %c0_1 = arith.constant 0 : index
    %0 = vector.load %arg1[%c0, %c0_0, %c0_1] : memref<1x8x32xf32, #tpu.memory_space<vmem>>, vector<1x8x32xf32>
    %1 = vector.shape_cast %0 : vector<1x8x32xf32> to vector<8x32xf32>
    %c0_2 = arith.constant 0 : index
    %c0_3 = arith.constant 0 : index
    %2 = vector.load %arg3[%c0_2, %c0_3] : memref<1x32xf32, #tpu.memory_space<vmem>>, vector<1x32xf32>
    %c0_4 = arith.constant 0 : index
    %c0_5 = arith.constant 0 : index
    %3 = vector.load %arg4[%c0_4, %c0_5] : memref<1x32xf32, #tpu.memory_space<vmem>>, vector<1x32xf32>
    %cst = arith.constant dense<0.000000e+00> : vector<8xf32>
    %4 = vector.multi_reduction <add>, %1, %cst [1] : vector<8x32xf32> to vector<8xf32>
    %5 = vector.shape_cast %4 : vector<8xf32> to vector<8x1xf32>
    %cst_6 = arith.constant 3.200000e+01 : f32
    %6 = vector.broadcast %cst_6 : f32 to vector<8x1xf32>
    %7 = arith.divf %5, %6 : vector<8x1xf32>
    %8 = vector.broadcast %7 : vector<8x1xf32> to vector<8x32xf32>
    %9 = arith.subf %1, %8 : vector<8x32xf32>
    %10 = arith.mulf %9, %9 : vector<8x32xf32>
    %cst_7 = arith.constant dense<0.000000e+00> : vector<8xf32>
    %11 = vector.multi_reduction <add>, %10, %cst_7 [1] : vector<8x32xf32> to vector<8xf32>
    %12 = vector.shape_cast %11 : vector<8xf32> to vector<8x1xf32>
    %cst_8 = arith.constant 3.200000e+01 : f32
    %13 = vector.broadcast %cst_8 : f32 to vector<8x1xf32>
    %14 = arith.divf %12, %13 : vector<8x1xf32>
    %15 = vector.broadcast %7 : vector<8x1xf32> to vector<8x32xf32>
    %16 = arith.subf %1, %15 : vector<8x32xf32>
    %cst_9 = arith.constant 9.99999996E-13 : f32
    %17 = vector.broadcast %cst_9 : f32 to vector<8x1xf32>
    %18 = arith.addf %14, %17 : vector<8x1xf32>
    %19 = math.rsqrt %18 : vector<8x1xf32>
    %20 = vector.broadcast %19 : vector<8x1xf32> to vector<8x32xf32>
    %21 = arith.mulf %16, %20 : vector<8x32xf32>
    %22 = vector.broadcast %2 : vector<1x32xf32> to vector<8x32xf32>
    %23 = arith.mulf %21, %22 : vector<8x32xf32>
    %24 = vector.broadcast %3 : vector<1x32xf32> to vector<8x32xf32>
    %25 = arith.addf %23, %24 : vector<8x32xf32>
    %c0_10 = arith.constant 0 : index
    %c0_11 = arith.constant 0 : index
    %c0_12 = arith.constant 0 : index
    %26 = vector.load %arg2[%c0_10, %c0_11, %c0_12] : memref<1x1x8xf32, #tpu.memory_space<vmem>>, vector<1x1x8xf32>
    %27 = vector.shape_cast %26 : vector<1x1x8xf32> to vector<1x8xf32>
    %c0_13 = arith.constant 0 : index
    %c0_14 = arith.constant 0 : index
    %c0_15 = arith.constant 0 : index
    %28 = vector.load %arg5[%c0_13, %c0_14, %c0_15] : memref<2x32x96xf32, #tpu.memory_space<vmem>>, vector<1x32x96xf32>
    %29 = vector.shape_cast %28 : vector<1x32x96xf32> to vector<32x96xf32>
    %cst_16 = arith.constant dense<0.000000e+00> : vector<8x96xf32>
    %30 = tpu.matmul %25, %29, %cst_16 {dimension_numbers = #tpu.dot_dimension_numbers<[1], [0], [0], [1], [0, 0, 1, 1], [], []>} : vector<8x32xf32>, vector<32x96xf32>, vector<8x96xf32> -> vector<8x96xf32>
    %c0_17 = arith.constant 0 : index
    %c0_18 = arith.constant 0 : index
    %c0_19 = arith.constant 0 : index
    %31 = vector.load %arg6[%c0_17, %c0_18, %c0_19] : memref<2x1x96xf32, #tpu.memory_space<vmem>>, vector<1x1x96xf32>
    %32 = vector.shape_cast %31 : vector<1x1x96xf32> to vector<1x96xf32>
    %33 = vector.broadcast %32 : vector<1x96xf32> to vector<8x96xf32>
    %34 = arith.addf %30, %33 : vector<8x96xf32>
    %c0_20 = arith.constant 0 : index
    %c0_21 = arith.constant 0 : index
    %c0_22 = arith.constant 0 : index
    %35 = vector.load %arg7[%c0_20, %c0_21, %c0_22] : memref<2x32x32xf32, #tpu.memory_space<vmem>>, vector<1x32x32xf32>
    %36 = vector.shape_cast %35 : vector<1x32x32xf32> to vector<32x32xf32>
    %cst_23 = arith.constant 0.000000e+00 : f32
    %37 = vector.broadcast %cst_23 : f32 to vector<8x32xf32>
    %38 = vector.extract_strided_slice %34 {offsets = [0, 0], sizes = [8, 8], strides = [1, 1]} : vector<8x96xf32> to vector<8x8xf32>
    %39 = vector.extract_strided_slice %34 {offsets = [0, 32], sizes = [8, 8], strides = [1, 1]} : vector<8x96xf32> to vector<8x8xf32>
    %40 = vector.extract_strided_slice %34 {offsets = [0, 64], sizes = [8, 8], strides = [1, 1]} : vector<8x96xf32> to vector<8x8xf32>
    %cst_24 = arith.constant dense<0.000000e+00> : vector<8x8xf32>
    %41 = tpu.matmul %38, %39, %cst_24 {dimension_numbers = #tpu.dot_dimension_numbers<[1], [1], [0], [0], [0, 0, 1, 0], [], []>} : vector<8x8xf32>, vector<8x8xf32>, vector<8x8xf32> -> vector<8x8xf32>
    %cst_25 = arith.constant 0.353553385 : f32
    %42 = vector.broadcast %cst_25 : f32 to vector<8x8xf32>
    %43 = arith.mulf %41, %42 : vector<8x8xf32>
    %44 = vector.broadcast %27 : vector<1x8xf32> to vector<8x8xf32>
    %45 = arith.addf %43, %44 : vector<8x8xf32>
    %cst_26 = arith.constant dense<0xFF800000> : vector<8xf32>
    %46 = vector.multi_reduction <maximumf>, %45, %cst_26 [1] : vector<8x8xf32> to vector<8xf32>
    %47 = vector.shape_cast %46 : vector<8xf32> to vector<8x1xf32>
    %48 = vector.broadcast %47 : vector<8x1xf32> to vector<8x8xf32>
    %49 = arith.subf %45, %48 : vector<8x8xf32>
    %50 = math.exp %49 : vector<8x8xf32>
    %cst_27 = arith.constant dense<0.000000e+00> : vector<8xf32>
    %51 = vector.multi_reduction <add>, %50, %cst_27 [1] : vector<8x8xf32> to vector<8xf32>
    %52 = vector.shape_cast %51 : vector<8xf32> to vector<8x1xf32>
    %53 = tpu.reciprocal %52 {approx = true} : vector<8x1xf32> -> vector<8x1xf32>
    %54 = vector.broadcast %53 : vector<8x1xf32> to vector<8x8xf32>
    %55 = arith.mulf %50, %54 : vector<8x8xf32>
    %cst_28 = arith.constant dense<0.000000e+00> : vector<8x8xf32>
    %56 = tpu.matmul %55, %40, %cst_28 {dimension_numbers = #tpu.dot_dimension_numbers<[1], [0], [0], [1], [0, 0, 1, 1], [], []>} : vector<8x8xf32>, vector<8x8xf32>, vector<8x8xf32> -> vector<8x8xf32>
    %57 = vector.extract_strided_slice %36 {offsets = [0, 0], sizes = [8, 32], strides = [1, 1]} : vector<32x32xf32> to vector<8x32xf32>
    %cst_29 = arith.constant dense<0.000000e+00> : vector<8x32xf32>
    %58 = tpu.matmul %56, %57, %cst_29 {dimension_numbers = #tpu.dot_dimension_numbers<[1], [0], [0], [1], [0, 0, 1, 1], [], []>} : vector<8x8xf32>, vector<8x32xf32>, vector<8x32xf32> -> vector<8x32xf32>
    %59 = arith.addf %37, %58 : vector<8x32xf32>
    %60 = vector.extract_strided_slice %34 {offsets = [0, 8], sizes = [8, 8], strides = [1, 1]} : vector<8x96xf32> to vector<8x8xf32>
    %61 = vector.extract_strided_slice %34 {offsets = [0, 40], sizes = [8, 8], strides = [1, 1]} : vector<8x96xf32> to vector<8x8xf32>
    %62 = vector.extract_strided_slice %34 {offsets = [0, 72], sizes = [8, 8], strides = [1, 1]} : vector<8x96xf32> to vector<8x8xf32>
    %cst_30 = arith.constant dense<0.000000e+00> : vector<8x8xf32>
    %63 = tpu.matmul %60, %61, %cst_30 {dimension_numbers = #tpu.dot_dimension_numbers<[1], [1], [0], [0], [0, 0, 1, 0], [], []>} : vector<8x8xf32>, vector<8x8xf32>, vector<8x8xf32> -> vector<8x8xf32>
    %cst_31 = arith.constant 0.353553385 : f32
    %64 = vector.broadcast %cst_31 : f32 to vector<8x8xf32>
    %65 = arith.mulf %63, %64 : vector<8x8xf32>
    %66 = vector.broadcast %27 : vector<1x8xf32> to vector<8x8xf32>
    %67 = arith.addf %65, %66 : vector<8x8xf32>
    %cst_32 = arith.constant dense<0xFF800000> : vector<8xf32>
    %68 = vector.multi_reduction <maximumf>, %67, %cst_32 [1] : vector<8x8xf32> to vector<8xf32>
    %69 = vector.shape_cast %68 : vector<8xf32> to vector<8x1xf32>
    %70 = vector.broadcast %69 : vector<8x1xf32> to vector<8x8xf32>
    %71 = arith.subf %67, %70 : vector<8x8xf32>
    %72 = math.exp %71 : vector<8x8xf32>
    %cst_33 = arith.constant dense<0.000000e+00> : vector<8xf32>
    %73 = vector.multi_reduction <add>, %72, %cst_33 [1] : vector<8x8xf32> to vector<8xf32>
    %74 = vector.shape_cast %73 : vector<8xf32> to vector<8x1xf32>
    %75 = tpu.reciprocal %74 {approx = true} : vector<8x1xf32> -> vector<8x1xf32>
    %76 = vector.broadcast %75 : vector<8x1xf32> to vector<8x8xf32>
    %77 = arith.mulf %72, %76 : vector<8x8xf32>
    %cst_34 = arith.constant dense<0.000000e+00> : vector<8x8xf32>
    %78 = tpu.matmul %77, %62, %cst_34 {dimension_numbers = #tpu.dot_dimension_numbers<[1], [0], [0], [1], [0, 0, 1, 1], [], []>} : vector<8x8xf32>, vector<8x8xf32>, vector<8x8xf32> -> vector<8x8xf32>
    %79 = vector.extract_strided_slice %36 {offsets = [8, 0], sizes = [8, 32], strides = [1, 1]} : vector<32x32xf32> to vector<8x32xf32>
    %cst_35 = arith.constant dense<0.000000e+00> : vector<8x32xf32>
    %80 = tpu.matmul %78, %79, %cst_35 {dimension_numbers = #tpu.dot_dimension_numbers<[1], [0], [0], [1], [0, 0, 1, 1], [], []>} : vector<8x8xf32>, vector<8x32xf32>, vector<8x32xf32> -> vector<8x32xf32>
    %81 = arith.addf %59, %80 : vector<8x32xf32>
    %82 = vector.extract_strided_slice %34 {offsets = [0, 16], sizes = [8, 8], strides = [1, 1]} : vector<8x96xf32> to vector<8x8xf32>
    %83 = vector.extract_strided_slice %34 {offsets = [0, 48], sizes = [8, 8], strides = [1, 1]} : vector<8x96xf32> to vector<8x8xf32>
    %84 = vector.extract_strided_slice %34 {offsets = [0, 80], sizes = [8, 8], strides = [1, 1]} : vector<8x96xf32> to vector<8x8xf32>
    %cst_36 = arith.constant dense<0.000000e+00> : vector<8x8xf32>
    %85 = tpu.matmul %82, %83, %cst_36 {dimension_numbers = #tpu.dot_dimension_numbers<[1], [1], [0], [0], [0, 0, 1, 0], [], []>} : vector<8x8xf32>, vector<8x8xf32>, vector<8x8xf32> -> vector<8x8xf32>
    %cst_37 = arith.constant 0.353553385 : f32
    %86 = vector.broadcast %cst_37 : f32 to vector<8x8xf32>
    %87 = arith.mulf %85, %86 : vector<8x8xf32>
    %88 = vector.broadcast %27 : vector<1x8xf32> to vector<8x8xf32>
    %89 = arith.addf %87, %88 : vector<8x8xf32>
    %cst_38 = arith.constant dense<0xFF800000> : vector<8xf32>
    %90 = vector.multi_reduction <maximumf>, %89, %cst_38 [1] : vector<8x8xf32> to vector<8xf32>
    %91 = vector.shape_cast %90 : vector<8xf32> to vector<8x1xf32>
    %92 = vector.broadcast %91 : vector<8x1xf32> to vector<8x8xf32>
    %93 = arith.subf %89, %92 : vector<8x8xf32>
    %94 = math.exp %93 : vector<8x8xf32>
    %cst_39 = arith.constant dense<0.000000e+00> : vector<8xf32>
    %95 = vector.multi_reduction <add>, %94, %cst_39 [1] : vector<8x8xf32> to vector<8xf32>
    %96 = vector.shape_cast %95 : vector<8xf32> to vector<8x1xf32>
    %97 = tpu.reciprocal %96 {approx = true} : vector<8x1xf32> -> vector<8x1xf32>
    %98 = vector.broadcast %97 : vector<8x1xf32> to vector<8x8xf32>
    %99 = arith.mulf %94, %98 : vector<8x8xf32>
    %cst_40 = arith.constant dense<0.000000e+00> : vector<8x8xf32>
    %100 = tpu.matmul %99, %84, %cst_40 {dimension_numbers = #tpu.dot_dimension_numbers<[1], [0], [0], [1], [0, 0, 1, 1], [], []>} : vector<8x8xf32>, vector<8x8xf32>, vector<8x8xf32> -> vector<8x8xf32>
    %101 = vector.extract_strided_slice %36 {offsets = [16, 0], sizes = [8, 32], strides = [1, 1]} : vector<32x32xf32> to vector<8x32xf32>
    %cst_41 = arith.constant dense<0.000000e+00> : vector<8x32xf32>
    %102 = tpu.matmul %100, %101, %cst_41 {dimension_numbers = #tpu.dot_dimension_numbers<[1], [0], [0], [1], [0, 0, 1, 1], [], []>} : vector<8x8xf32>, vector<8x32xf32>, vector<8x32xf32> -> vector<8x32xf32>
    %103 = arith.addf %81, %102 : vector<8x32xf32>
    %104 = vector.extract_strided_slice %34 {offsets = [0, 24], sizes = [8, 8], strides = [1, 1]} : vector<8x96xf32> to vector<8x8xf32>
    %105 = vector.extract_strided_slice %34 {offsets = [0, 56], sizes = [8, 8], strides = [1, 1]} : vector<8x96xf32> to vector<8x8xf32>
    %106 = vector.extract_strided_slice %34 {offsets = [0, 88], sizes = [8, 8], strides = [1, 1]} : vector<8x96xf32> to vector<8x8xf32>
    %cst_42 = arith.constant dense<0.000000e+00> : vector<8x8xf32>
    %107 = tpu.matmul %104, %105, %cst_42 {dimension_numbers = #tpu.dot_dimension_numbers<[1], [1], [0], [0], [0, 0, 1, 0], [], []>} : vector<8x8xf32>, vector<8x8xf32>, vector<8x8xf32> -> vector<8x8xf32>
    %cst_43 = arith.constant 0.353553385 : f32
    %108 = vector.broadcast %cst_43 : f32 to vector<8x8xf32>
    %109 = arith.mulf %107, %108 : vector<8x8xf32>
    %110 = vector.broadcast %27 : vector<1x8xf32> to vector<8x8xf32>
    %111 = arith.addf %109, %110 : vector<8x8xf32>
    %cst_44 = arith.constant dense<0xFF800000> : vector<8xf32>
    %112 = vector.multi_reduction <maximumf>, %111, %cst_44 [1] : vector<8x8xf32> to vector<8xf32>
    %113 = vector.shape_cast %112 : vector<8xf32> to vector<8x1xf32>
    %114 = vector.broadcast %113 : vector<8x1xf32> to vector<8x8xf32>
    %115 = arith.subf %111, %114 : vector<8x8xf32>
    %116 = math.exp %115 : vector<8x8xf32>
    %cst_45 = arith.constant dense<0.000000e+00> : vector<8xf32>
    %117 = vector.multi_reduction <add>, %116, %cst_45 [1] : vector<8x8xf32> to vector<8xf32>
    %118 = vector.shape_cast %117 : vector<8xf32> to vector<8x1xf32>
    %119 = tpu.reciprocal %118 {approx = true} : vector<8x1xf32> -> vector<8x1xf32>
    %120 = vector.broadcast %119 : vector<8x1xf32> to vector<8x8xf32>
    %121 = arith.mulf %116, %120 : vector<8x8xf32>
    %cst_46 = arith.constant dense<0.000000e+00> : vector<8x8xf32>
    %122 = tpu.matmul %121, %106, %cst_46 {dimension_numbers = #tpu.dot_dimension_numbers<[1], [0], [0], [1], [0, 0, 1, 1], [], []>} : vector<8x8xf32>, vector<8x8xf32>, vector<8x8xf32> -> vector<8x8xf32>
    %123 = vector.extract_strided_slice %36 {offsets = [24, 0], sizes = [8, 32], strides = [1, 1]} : vector<32x32xf32> to vector<8x32xf32>
    %cst_47 = arith.constant dense<0.000000e+00> : vector<8x32xf32>
    %124 = tpu.matmul %122, %123, %cst_47 {dimension_numbers = #tpu.dot_dimension_numbers<[1], [0], [0], [1], [0, 0, 1, 1], [], []>} : vector<8x8xf32>, vector<8x32xf32>, vector<8x32xf32> -> vector<8x32xf32>
    %125 = arith.addf %103, %124 : vector<8x32xf32>
    %c0_48 = arith.constant 0 : index
    %c0_49 = arith.constant 0 : index
    %c0_50 = arith.constant 0 : index
    %126 = vector.load %arg8[%c0_48, %c0_49, %c0_50] : memref<2x1x32xf32, #tpu.memory_space<vmem>>, vector<1x1x32xf32>
    %127 = vector.shape_cast %126 : vector<1x1x32xf32> to vector<1x32xf32>
    %128 = vector.broadcast %127 : vector<1x32xf32> to vector<8x32xf32>
    %129 = arith.addf %125, %128 : vector<8x32xf32>
    %130 = arith.addf %25, %129 : vector<8x32xf32>
    %c0_51 = arith.constant 0 : index
    %c0_52 = arith.constant 0 : index
    %c0_53 = arith.constant 0 : index
    %131 = vector.load %arg9[%c0_51, %c0_52, %c0_53] : memref<2x1x32xf32, #tpu.memory_space<vmem>>, vector<1x1x32xf32>
    %132 = vector.shape_cast %131 : vector<1x1x32xf32> to vector<1x32xf32>
    %c0_54 = arith.constant 0 : index
    %c0_55 = arith.constant 0 : index
    %c0_56 = arith.constant 0 : index
    %133 = vector.load %arg10[%c0_54, %c0_55, %c0_56] : memref<2x1x32xf32, #tpu.memory_space<vmem>>, vector<1x1x32xf32>
    %134 = vector.shape_cast %133 : vector<1x1x32xf32> to vector<1x32xf32>
    %cst_57 = arith.constant dense<0.000000e+00> : vector<8xf32>
    %135 = vector.multi_reduction <add>, %130, %cst_57 [1] : vector<8x32xf32> to vector<8xf32>
    %136 = vector.shape_cast %135 : vector<8xf32> to vector<8x1xf32>
    %cst_58 = arith.constant 3.200000e+01 : f32
    %137 = vector.broadcast %cst_58 : f32 to vector<8x1xf32>
    %138 = arith.divf %136, %137 : vector<8x1xf32>
    %139 = vector.broadcast %138 : vector<8x1xf32> to vector<8x32xf32>
    %140 = arith.subf %130, %139 : vector<8x32xf32>
    %141 = arith.mulf %140, %140 : vector<8x32xf32>
    %cst_59 = arith.constant dense<0.000000e+00> : vector<8xf32>
    %142 = vector.multi_reduction <add>, %141, %cst_59 [1] : vector<8x32xf32> to vector<8xf32>
    %143 = vector.shape_cast %142 : vector<8xf32> to vector<8x1xf32>
    %cst_60 = arith.constant 3.200000e+01 : f32
    %144 = vector.broadcast %cst_60 : f32 to vector<8x1xf32>
    %145 = arith.divf %143, %144 : vector<8x1xf32>
    %146 = vector.broadcast %138 : vector<8x1xf32> to vector<8x32xf32>
    %147 = arith.subf %130, %146 : vector<8x32xf32>
    %cst_61 = arith.constant 9.99999996E-13 : f32
    %148 = vector.broadcast %cst_61 : f32 to vector<8x1xf32>
    %149 = arith.addf %145, %148 : vector<8x1xf32>
    %150 = math.rsqrt %149 : vector<8x1xf32>
    %151 = vector.broadcast %150 : vector<8x1xf32> to vector<8x32xf32>
    %152 = arith.mulf %147, %151 : vector<8x32xf32>
    %153 = vector.broadcast %132 : vector<1x32xf32> to vector<8x32xf32>
    %154 = arith.mulf %152, %153 : vector<8x32xf32>
    %155 = vector.broadcast %134 : vector<1x32xf32> to vector<8x32xf32>
    %156 = arith.addf %154, %155 : vector<8x32xf32>
    %c0_62 = arith.constant 0 : index
    %c0_63 = arith.constant 0 : index
    %c0_64 = arith.constant 0 : index
    %157 = vector.load %arg11[%c0_62, %c0_63, %c0_64] : memref<2x32x64xf32, #tpu.memory_space<vmem>>, vector<1x32x64xf32>
    %158 = vector.shape_cast %157 : vector<1x32x64xf32> to vector<32x64xf32>
    %cst_65 = arith.constant dense<0.000000e+00> : vector<8x64xf32>
    %159 = tpu.matmul %156, %158, %cst_65 {dimension_numbers = #tpu.dot_dimension_numbers<[1], [0], [0], [1], [0, 0, 1, 1], [], []>} : vector<8x32xf32>, vector<32x64xf32>, vector<8x64xf32> -> vector<8x64xf32>
    %c0_66 = arith.constant 0 : index
    %c0_67 = arith.constant 0 : index
    %c0_68 = arith.constant 0 : index
    %160 = vector.load %arg12[%c0_66, %c0_67, %c0_68] : memref<2x1x64xf32, #tpu.memory_space<vmem>>, vector<1x1x64xf32>
    %161 = vector.shape_cast %160 : vector<1x1x64xf32> to vector<1x64xf32>
    %162 = vector.broadcast %161 : vector<1x64xf32> to vector<8x64xf32>
    %163 = arith.addf %159, %162 : vector<8x64xf32>
    %cst_69 = arith.constant 5.000000e-01 : f32
    %164 = vector.broadcast %cst_69 : f32 to vector<8x64xf32>
    %165 = arith.mulf %164, %163 : vector<8x64xf32>
    %cst_70 = arith.constant 4.471500e-02 : f32
    %166 = vector.broadcast %cst_70 : f32 to vector<8x64xf32>
    %167 = arith.mulf %166, %163 : vector<8x64xf32>
    %168 = arith.mulf %167, %163 : vector<8x64xf32>
    %169 = arith.mulf %168, %163 : vector<8x64xf32>
    %170 = arith.addf %163, %169 : vector<8x64xf32>
    %cst_71 = arith.constant 0.797884583 : f32
    %171 = vector.broadcast %cst_71 : f32 to vector<8x64xf32>
    %172 = arith.mulf %171, %170 : vector<8x64xf32>
    %173 = math.tanh %172 : vector<8x64xf32>
    %cst_72 = arith.constant 1.000000e+00 : f32
    %174 = vector.broadcast %cst_72 : f32 to vector<8x64xf32>
    %175 = arith.addf %174, %173 : vector<8x64xf32>
    %176 = arith.mulf %165, %175 : vector<8x64xf32>
    %c0_73 = arith.constant 0 : index
    %c0_74 = arith.constant 0 : index
    %c0_75 = arith.constant 0 : index
    %177 = vector.load %arg13[%c0_73, %c0_74, %c0_75] : memref<2x64x32xf32, #tpu.memory_space<vmem>>, vector<1x64x32xf32>
    %178 = vector.shape_cast %177 : vector<1x64x32xf32> to vector<64x32xf32>
    %cst_76 = arith.constant dense<0.000000e+00> : vector<8x32xf32>
    %179 = tpu.matmul %176, %178, %cst_76 {dimension_numbers = #tpu.dot_dimension_numbers<[1], [0], [0], [1], [0, 0, 1, 1], [], []>} : vector<8x64xf32>, vector<64x32xf32>, vector<8x32xf32> -> vector<8x32xf32>
    %c0_77 = arith.constant 0 : index
    %c0_78 = arith.constant 0 : index
    %c0_79 = arith.constant 0 : index
    %180 = vector.load %arg14[%c0_77, %c0_78, %c0_79] : memref<2x1x32xf32, #tpu.memory_space<vmem>>, vector<1x1x32xf32>
    %181 = vector.shape_cast %180 : vector<1x1x32xf32> to vector<1x32xf32>
    %182 = vector.broadcast %181 : vector<1x32xf32> to vector<8x32xf32>
    %183 = arith.addf %179, %182 : vector<8x32xf32>
    %184 = arith.addf %156, %183 : vector<8x32xf32>
    %c0_80 = arith.constant 0 : index
    %c0_81 = arith.constant 0 : index
    %c0_82 = arith.constant 0 : index
    %185 = vector.load %arg15[%c0_80, %c0_81, %c0_82] : memref<2x1x32xf32, #tpu.memory_space<vmem>>, vector<1x1x32xf32>
    %186 = vector.shape_cast %185 : vector<1x1x32xf32> to vector<1x32xf32>
    %c0_83 = arith.constant 0 : index
    %c0_84 = arith.constant 0 : index
    %c0_85 = arith.constant 0 : index
    %187 = vector.load %arg16[%c0_83, %c0_84, %c0_85] : memref<2x1x32xf32, #tpu.memory_space<vmem>>, vector<1x1x32xf32>
    %188 = vector.shape_cast %187 : vector<1x1x32xf32> to vector<1x32xf32>
    %cst_86 = arith.constant dense<0.000000e+00> : vector<8xf32>
    %189 = vector.multi_reduction <add>, %184, %cst_86 [1] : vector<8x32xf32> to vector<8xf32>
    %190 = vector.shape_cast %189 : vector<8xf32> to vector<8x1xf32>
    %cst_87 = arith.constant 3.200000e+01 : f32
    %191 = vector.broadcast %cst_87 : f32 to vector<8x1xf32>
    %192 = arith.divf %190, %191 : vector<8x1xf32>
    %193 = vector.broadcast %192 : vector<8x1xf32> to vector<8x32xf32>
    %194 = arith.subf %184, %193 : vector<8x32xf32>
    %195 = arith.mulf %194, %194 : vector<8x32xf32>
    %cst_88 = arith.constant dense<0.000000e+00> : vector<8xf32>
    %196 = vector.multi_reduction <add>, %195, %cst_88 [1] : vector<8x32xf32> to vector<8xf32>
    %197 = vector.shape_cast %196 : vector<8xf32> to vector<8x1xf32>
    %cst_89 = arith.constant 3.200000e+01 : f32
    %198 = vector.broadcast %cst_89 : f32 to vector<8x1xf32>
    %199 = arith.divf %197, %198 : vector<8x1xf32>
    %200 = vector.broadcast %192 : vector<8x1xf32> to vector<8x32xf32>
    %201 = arith.subf %184, %200 : vector<8x32xf32>
    %cst_90 = arith.constant 9.99999996E-13 : f32
    %202 = vector.broadcast %cst_90 : f32 to vector<8x1xf32>
    %203 = arith.addf %199, %202 : vector<8x1xf32>
    %204 = math.rsqrt %203 : vector<8x1xf32>
    %205 = vector.broadcast %204 : vector<8x1xf32> to vector<8x32xf32>
    %206 = arith.mulf %201, %205 : vector<8x32xf32>
    %207 = vector.broadcast %186 : vector<1x32xf32> to vector<8x32xf32>
    %208 = arith.mulf %206, %207 : vector<8x32xf32>
    %209 = vector.broadcast %188 : vector<1x32xf32> to vector<8x32xf32>
    %210 = arith.addf %208, %209 : vector<8x32xf32>
    %c1 = arith.constant 1 : index
    %c0_91 = arith.constant 0 : index
    %c0_92 = arith.constant 0 : index
    %211 = vector.load %arg5[%c1, %c0_91, %c0_92] : memref<2x32x96xf32, #tpu.memory_space<vmem>>, vector<1x32x96xf32>
    %212 = vector.shape_cast %211 : vector<1x32x96xf32> to vector<32x96xf32>
    %cst_93 = arith.constant dense<0.000000e+00> : vector<8x96xf32>
    %213 = tpu.matmul %210, %212, %cst_93 {dimension_numbers = #tpu.dot_dimension_numbers<[1], [0], [0], [1], [0, 0, 1, 1], [], []>} : vector<8x32xf32>, vector<32x96xf32>, vector<8x96xf32> -> vector<8x96xf32>
    %c1_94 = arith.constant 1 : index
    %c0_95 = arith.constant 0 : index
    %c0_96 = arith.constant 0 : index
    %214 = vector.load %arg6[%c1_94, %c0_95, %c0_96] : memref<2x1x96xf32, #tpu.memory_space<vmem>>, vector<1x1x96xf32>
    %215 = vector.shape_cast %214 : vector<1x1x96xf32> to vector<1x96xf32>
    %216 = vector.broadcast %215 : vector<1x96xf32> to vector<8x96xf32>
    %217 = arith.addf %213, %216 : vector<8x96xf32>
    %c1_97 = arith.constant 1 : index
    %c0_98 = arith.constant 0 : index
    %c0_99 = arith.constant 0 : index
    %218 = vector.load %arg7[%c1_97, %c0_98, %c0_99] : memref<2x32x32xf32, #tpu.memory_space<vmem>>, vector<1x32x32xf32>
    %219 = vector.shape_cast %218 : vector<1x32x32xf32> to vector<32x32xf32>
    %cst_100 = arith.constant 0.000000e+00 : f32
    %220 = vector.broadcast %cst_100 : f32 to vector<8x32xf32>
    %221 = vector.extract_strided_slice %217 {offsets = [0, 0], sizes = [8, 8], strides = [1, 1]} : vector<8x96xf32> to vector<8x8xf32>
    %222 = vector.extract_strided_slice %217 {offsets = [0, 32], sizes = [8, 8], strides = [1, 1]} : vector<8x96xf32> to vector<8x8xf32>
    %223 = vector.extract_strided_slice %217 {offsets = [0, 64], sizes = [8, 8], strides = [1, 1]} : vector<8x96xf32> to vector<8x8xf32>
    %cst_101 = arith.constant dense<0.000000e+00> : vector<8x8xf32>
    %224 = tpu.matmul %221, %222, %cst_101 {dimension_numbers = #tpu.dot_dimension_numbers<[1], [1], [0], [0], [0, 0, 1, 0], [], []>} : vector<8x8xf32>, vector<8x8xf32>, vector<8x8xf32> -> vector<8x8xf32>
    %cst_102 = arith.constant 0.353553385 : f32
    %225 = vector.broadcast %cst_102 : f32 to vector<8x8xf32>
    %226 = arith.mulf %224, %225 : vector<8x8xf32>
    %227 = vector.broadcast %27 : vector<1x8xf32> to vector<8x8xf32>
    %228 = arith.addf %226, %227 : vector<8x8xf32>
    %cst_103 = arith.constant dense<0xFF800000> : vector<8xf32>
    %229 = vector.multi_reduction <maximumf>, %228, %cst_103 [1] : vector<8x8xf32> to vector<8xf32>
    %230 = vector.shape_cast %229 : vector<8xf32> to vector<8x1xf32>
    %231 = vector.broadcast %230 : vector<8x1xf32> to vector<8x8xf32>
    %232 = arith.subf %228, %231 : vector<8x8xf32>
    %233 = math.exp %232 : vector<8x8xf32>
    %cst_104 = arith.constant dense<0.000000e+00> : vector<8xf32>
    %234 = vector.multi_reduction <add>, %233, %cst_104 [1] : vector<8x8xf32> to vector<8xf32>
    %235 = vector.shape_cast %234 : vector<8xf32> to vector<8x1xf32>
    %236 = tpu.reciprocal %235 {approx = true} : vector<8x1xf32> -> vector<8x1xf32>
    %237 = vector.broadcast %236 : vector<8x1xf32> to vector<8x8xf32>
    %238 = arith.mulf %233, %237 : vector<8x8xf32>
    %cst_105 = arith.constant dense<0.000000e+00> : vector<8x8xf32>
    %239 = tpu.matmul %238, %223, %cst_105 {dimension_numbers = #tpu.dot_dimension_numbers<[1], [0], [0], [1], [0, 0, 1, 1], [], []>} : vector<8x8xf32>, vector<8x8xf32>, vector<8x8xf32> -> vector<8x8xf32>
    %240 = vector.extract_strided_slice %219 {offsets = [0, 0], sizes = [8, 32], strides = [1, 1]} : vector<32x32xf32> to vector<8x32xf32>
    %cst_106 = arith.constant dense<0.000000e+00> : vector<8x32xf32>
    %241 = tpu.matmul %239, %240, %cst_106 {dimension_numbers = #tpu.dot_dimension_numbers<[1], [0], [0], [1], [0, 0, 1, 1], [], []>} : vector<8x8xf32>, vector<8x32xf32>, vector<8x32xf32> -> vector<8x32xf32>
    %242 = arith.addf %220, %241 : vector<8x32xf32>
    %243 = vector.extract_strided_slice %217 {offsets = [0, 8], sizes = [8, 8], strides = [1, 1]} : vector<8x96xf32> to vector<8x8xf32>
    %244 = vector.extract_strided_slice %217 {offsets = [0, 40], sizes = [8, 8], strides = [1, 1]} : vector<8x96xf32> to vector<8x8xf32>
    %245 = vector.extract_strided_slice %217 {offsets = [0, 72], sizes = [8, 8], strides = [1, 1]} : vector<8x96xf32> to vector<8x8xf32>
    %cst_107 = arith.constant dense<0.000000e+00> : vector<8x8xf32>
    %246 = tpu.matmul %243, %244, %cst_107 {dimension_numbers = #tpu.dot_dimension_numbers<[1], [1], [0], [0], [0, 0, 1, 0], [], []>} : vector<8x8xf32>, vector<8x8xf32>, vector<8x8xf32> -> vector<8x8xf32>
    %cst_108 = arith.constant 0.353553385 : f32
    %247 = vector.broadcast %cst_108 : f32 to vector<8x8xf32>
    %248 = arith.mulf %246, %247 : vector<8x8xf32>
    %249 = vector.broadcast %27 : vector<1x8xf32> to vector<8x8xf32>
    %250 = arith.addf %248, %249 : vector<8x8xf32>
    %cst_109 = arith.constant dense<0xFF800000> : vector<8xf32>
    %251 = vector.multi_reduction <maximumf>, %250, %cst_109 [1] : vector<8x8xf32> to vector<8xf32>
    %252 = vector.shape_cast %251 : vector<8xf32> to vector<8x1xf32>
    %253 = vector.broadcast %252 : vector<8x1xf32> to vector<8x8xf32>
    %254 = arith.subf %250, %253 : vector<8x8xf32>
    %255 = math.exp %254 : vector<8x8xf32>
    %cst_110 = arith.constant dense<0.000000e+00> : vector<8xf32>
    %256 = vector.multi_reduction <add>, %255, %cst_110 [1] : vector<8x8xf32> to vector<8xf32>
    %257 = vector.shape_cast %256 : vector<8xf32> to vector<8x1xf32>
    %258 = tpu.reciprocal %257 {approx = true} : vector<8x1xf32> -> vector<8x1xf32>
    %259 = vector.broadcast %258 : vector<8x1xf32> to vector<8x8xf32>
    %260 = arith.mulf %255, %259 : vector<8x8xf32>
    %cst_111 = arith.constant dense<0.000000e+00> : vector<8x8xf32>
    %261 = tpu.matmul %260, %245, %cst_111 {dimension_numbers = #tpu.dot_dimension_numbers<[1], [0], [0], [1], [0, 0, 1, 1], [], []>} : vector<8x8xf32>, vector<8x8xf32>, vector<8x8xf32> -> vector<8x8xf32>
    %262 = vector.extract_strided_slice %219 {offsets = [8, 0], sizes = [8, 32], strides = [1, 1]} : vector<32x32xf32> to vector<8x32xf32>
    %cst_112 = arith.constant dense<0.000000e+00> : vector<8x32xf32>
    %263 = tpu.matmul %261, %262, %cst_112 {dimension_numbers = #tpu.dot_dimension_numbers<[1], [0], [0], [1], [0, 0, 1, 1], [], []>} : vector<8x8xf32>, vector<8x32xf32>, vector<8x32xf32> -> vector<8x32xf32>
    %264 = arith.addf %242, %263 : vector<8x32xf32>
    %265 = vector.extract_strided_slice %217 {offsets = [0, 16], sizes = [8, 8], strides = [1, 1]} : vector<8x96xf32> to vector<8x8xf32>
    %266 = vector.extract_strided_slice %217 {offsets = [0, 48], sizes = [8, 8], strides = [1, 1]} : vector<8x96xf32> to vector<8x8xf32>
    %267 = vector.extract_strided_slice %217 {offsets = [0, 80], sizes = [8, 8], strides = [1, 1]} : vector<8x96xf32> to vector<8x8xf32>
    %cst_113 = arith.constant dense<0.000000e+00> : vector<8x8xf32>
    %268 = tpu.matmul %265, %266, %cst_113 {dimension_numbers = #tpu.dot_dimension_numbers<[1], [1], [0], [0], [0, 0, 1, 0], [], []>} : vector<8x8xf32>, vector<8x8xf32>, vector<8x8xf32> -> vector<8x8xf32>
    %cst_114 = arith.constant 0.353553385 : f32
    %269 = vector.broadcast %cst_114 : f32 to vector<8x8xf32>
    %270 = arith.mulf %268, %269 : vector<8x8xf32>
    %271 = vector.broadcast %27 : vector<1x8xf32> to vector<8x8xf32>
    %272 = arith.addf %270, %271 : vector<8x8xf32>
    %cst_115 = arith.constant dense<0xFF800000> : vector<8xf32>
    %273 = vector.multi_reduction <maximumf>, %272, %cst_115 [1] : vector<8x8xf32> to vector<8xf32>
    %274 = vector.shape_cast %273 : vector<8xf32> to vector<8x1xf32>
    %275 = vector.broadcast %274 : vector<8x1xf32> to vector<8x8xf32>
    %276 = arith.subf %272, %275 : vector<8x8xf32>
    %277 = math.exp %276 : vector<8x8xf32>
    %cst_116 = arith.constant dense<0.000000e+00> : vector<8xf32>
    %278 = vector.multi_reduction <add>, %277, %cst_116 [1] : vector<8x8xf32> to vector<8xf32>
    %279 = vector.shape_cast %278 : vector<8xf32> to vector<8x1xf32>
    %280 = tpu.reciprocal %279 {approx = true} : vector<8x1xf32> -> vector<8x1xf32>
    %281 = vector.broadcast %280 : vector<8x1xf32> to vector<8x8xf32>
    %282 = arith.mulf %277, %281 : vector<8x8xf32>
    %cst_117 = arith.constant dense<0.000000e+00> : vector<8x8xf32>
    %283 = tpu.matmul %282, %267, %cst_117 {dimension_numbers = #tpu.dot_dimension_numbers<[1], [0], [0], [1], [0, 0, 1, 1], [], []>} : vector<8x8xf32>, vector<8x8xf32>, vector<8x8xf32> -> vector<8x8xf32>
    %284 = vector.extract_strided_slice %219 {offsets = [16, 0], sizes = [8, 32], strides = [1, 1]} : vector<32x32xf32> to vector<8x32xf32>
    %cst_118 = arith.constant dense<0.000000e+00> : vector<8x32xf32>
    %285 = tpu.matmul %283, %284, %cst_118 {dimension_numbers = #tpu.dot_dimension_numbers<[1], [0], [0], [1], [0, 0, 1, 1], [], []>} : vector<8x8xf32>, vector<8x32xf32>, vector<8x32xf32> -> vector<8x32xf32>
    %286 = arith.addf %264, %285 : vector<8x32xf32>
    %287 = vector.extract_strided_slice %217 {offsets = [0, 24], sizes = [8, 8], strides = [1, 1]} : vector<8x96xf32> to vector<8x8xf32>
    %288 = vector.extract_strided_slice %217 {offsets = [0, 56], sizes = [8, 8], strides = [1, 1]} : vector<8x96xf32> to vector<8x8xf32>
    %289 = vector.extract_strided_slice %217 {offsets = [0, 88], sizes = [8, 8], strides = [1, 1]} : vector<8x96xf32> to vector<8x8xf32>
    %cst_119 = arith.constant dense<0.000000e+00> : vector<8x8xf32>
    %290 = tpu.matmul %287, %288, %cst_119 {dimension_numbers = #tpu.dot_dimension_numbers<[1], [1], [0], [0], [0, 0, 1, 0], [], []>} : vector<8x8xf32>, vector<8x8xf32>, vector<8x8xf32> -> vector<8x8xf32>
    %cst_120 = arith.constant 0.353553385 : f32
    %291 = vector.broadcast %cst_120 : f32 to vector<8x8xf32>
    %292 = arith.mulf %290, %291 : vector<8x8xf32>
    %293 = vector.broadcast %27 : vector<1x8xf32> to vector<8x8xf32>
    %294 = arith.addf %292, %293 : vector<8x8xf32>
    %cst_121 = arith.constant dense<0xFF800000> : vector<8xf32>
    %295 = vector.multi_reduction <maximumf>, %294, %cst_121 [1] : vector<8x8xf32> to vector<8xf32>
    %296 = vector.shape_cast %295 : vector<8xf32> to vector<8x1xf32>
    %297 = vector.broadcast %296 : vector<8x1xf32> to vector<8x8xf32>
    %298 = arith.subf %294, %297 : vector<8x8xf32>
    %299 = math.exp %298 : vector<8x8xf32>
    %cst_122 = arith.constant dense<0.000000e+00> : vector<8xf32>
    %300 = vector.multi_reduction <add>, %299, %cst_122 [1] : vector<8x8xf32> to vector<8xf32>
    %301 = vector.shape_cast %300 : vector<8xf32> to vector<8x1xf32>
    %302 = tpu.reciprocal %301 {approx = true} : vector<8x1xf32> -> vector<8x1xf32>
    %303 = vector.broadcast %302 : vector<8x1xf32> to vector<8x8xf32>
    %304 = arith.mulf %299, %303 : vector<8x8xf32>
    %cst_123 = arith.constant dense<0.000000e+00> : vector<8x8xf32>
    %305 = tpu.matmul %304, %289, %cst_123 {dimension_numbers = #tpu.dot_dimension_numbers<[1], [0], [0], [1], [0, 0, 1, 1], [], []>} : vector<8x8xf32>, vector<8x8xf32>, vector<8x8xf32> -> vector<8x8xf32>
    %306 = vector.extract_strided_slice %219 {offsets = [24, 0], sizes = [8, 32], strides = [1, 1]} : vector<32x32xf32> to vector<8x32xf32>
    %cst_124 = arith.constant dense<0.000000e+00> : vector<8x32xf32>
    %307 = tpu.matmul %305, %306, %cst_124 {dimension_numbers = #tpu.dot_dimension_numbers<[1], [0], [0], [1], [0, 0, 1, 1], [], []>} : vector<8x8xf32>, vector<8x32xf32>, vector<8x32xf32> -> vector<8x32xf32>
    %308 = arith.addf %286, %307 : vector<8x32xf32>
    %c1_125 = arith.constant 1 : index
    %c0_126 = arith.constant 0 : index
    %c0_127 = arith.constant 0 : index
    %309 = vector.load %arg8[%c1_125, %c0_126, %c0_127] : memref<2x1x32xf32, #tpu.memory_space<vmem>>, vector<1x1x32xf32>
    %310 = vector.shape_cast %309 : vector<1x1x32xf32> to vector<1x32xf32>
    %311 = vector.broadcast %310 : vector<1x32xf32> to vector<8x32xf32>
    %312 = arith.addf %308, %311 : vector<8x32xf32>
    %313 = arith.addf %210, %312 : vector<8x32xf32>
    %c1_128 = arith.constant 1 : index
    %c0_129 = arith.constant 0 : index
    %c0_130 = arith.constant 0 : index
    %314 = vector.load %arg9[%c1_128, %c0_129, %c0_130] : memref<2x1x32xf32, #tpu.memory_space<vmem>>, vector<1x1x32xf32>
    %315 = vector.shape_cast %314 : vector<1x1x32xf32> to vector<1x32xf32>
    %c1_131 = arith.constant 1 : index
    %c0_132 = arith.constant 0 : index
    %c0_133 = arith.constant 0 : index
    %316 = vector.load %arg10[%c1_131, %c0_132, %c0_133] : memref<2x1x32xf32, #tpu.memory_space<vmem>>, vector<1x1x32xf32>
    %317 = vector.shape_cast %316 : vector<1x1x32xf32> to vector<1x32xf32>
    %cst_134 = arith.constant dense<0.000000e+00> : vector<8xf32>
    %318 = vector.multi_reduction <add>, %313, %cst_134 [1] : vector<8x32xf32> to vector<8xf32>
    %319 = vector.shape_cast %318 : vector<8xf32> to vector<8x1xf32>
    %cst_135 = arith.constant 3.200000e+01 : f32
    %320 = vector.broadcast %cst_135 : f32 to vector<8x1xf32>
    %321 = arith.divf %319, %320 : vector<8x1xf32>
    %322 = vector.broadcast %321 : vector<8x1xf32> to vector<8x32xf32>
    %323 = arith.subf %313, %322 : vector<8x32xf32>
    %324 = arith.mulf %323, %323 : vector<8x32xf32>
    %cst_136 = arith.constant dense<0.000000e+00> : vector<8xf32>
    %325 = vector.multi_reduction <add>, %324, %cst_136 [1] : vector<8x32xf32> to vector<8xf32>
    %326 = vector.shape_cast %325 : vector<8xf32> to vector<8x1xf32>
    %cst_137 = arith.constant 3.200000e+01 : f32
    %327 = vector.broadcast %cst_137 : f32 to vector<8x1xf32>
    %328 = arith.divf %326, %327 : vector<8x1xf32>
    %329 = vector.broadcast %321 : vector<8x1xf32> to vector<8x32xf32>
    %330 = arith.subf %313, %329 : vector<8x32xf32>
    %cst_138 = arith.constant 9.99999996E-13 : f32
    %331 = vector.broadcast %cst_138 : f32 to vector<8x1xf32>
    %332 = arith.addf %328, %331 : vector<8x1xf32>
    %333 = math.rsqrt %332 : vector<8x1xf32>
    %334 = vector.broadcast %333 : vector<8x1xf32> to vector<8x32xf32>
    %335 = arith.mulf %330, %334 : vector<8x32xf32>
    %336 = vector.broadcast %315 : vector<1x32xf32> to vector<8x32xf32>
    %337 = arith.mulf %335, %336 : vector<8x32xf32>
    %338 = vector.broadcast %317 : vector<1x32xf32> to vector<8x32xf32>
    %339 = arith.addf %337, %338 : vector<8x32xf32>
    %c1_139 = arith.constant 1 : index
    %c0_140 = arith.constant 0 : index
    %c0_141 = arith.constant 0 : index
    %340 = vector.load %arg11[%c1_139, %c0_140, %c0_141] : memref<2x32x64xf32, #tpu.memory_space<vmem>>, vector<1x32x64xf32>
    %341 = vector.shape_cast %340 : vector<1x32x64xf32> to vector<32x64xf32>
    %cst_142 = arith.constant dense<0.000000e+00> : vector<8x64xf32>
    %342 = tpu.matmul %339, %341, %cst_142 {dimension_numbers = #tpu.dot_dimension_numbers<[1], [0], [0], [1], [0, 0, 1, 1], [], []>} : vector<8x32xf32>, vector<32x64xf32>, vector<8x64xf32> -> vector<8x64xf32>
    %c1_143 = arith.constant 1 : index
    %c0_144 = arith.constant 0 : index
    %c0_145 = arith.constant 0 : index
    %343 = vector.load %arg12[%c1_143, %c0_144, %c0_145] : memref<2x1x64xf32, #tpu.memory_space<vmem>>, vector<1x1x64xf32>
    %344 = vector.shape_cast %343 : vector<1x1x64xf32> to vector<1x64xf32>
    %345 = vector.broadcast %344 : vector<1x64xf32> to vector<8x64xf32>
    %346 = arith.addf %342, %345 : vector<8x64xf32>
    %cst_146 = arith.constant 5.000000e-01 : f32
    %347 = vector.broadcast %cst_146 : f32 to vector<8x64xf32>
    %348 = arith.mulf %347, %346 : vector<8x64xf32>
    %cst_147 = arith.constant 4.471500e-02 : f32
    %349 = vector.broadcast %cst_147 : f32 to vector<8x64xf32>
    %350 = arith.mulf %349, %346 : vector<8x64xf32>
    %351 = arith.mulf %350, %346 : vector<8x64xf32>
    %352 = arith.mulf %351, %346 : vector<8x64xf32>
    %353 = arith.addf %346, %352 : vector<8x64xf32>
    %cst_148 = arith.constant 0.797884583 : f32
    %354 = vector.broadcast %cst_148 : f32 to vector<8x64xf32>
    %355 = arith.mulf %354, %353 : vector<8x64xf32>
    %356 = math.tanh %355 : vector<8x64xf32>
    %cst_149 = arith.constant 1.000000e+00 : f32
    %357 = vector.broadcast %cst_149 : f32 to vector<8x64xf32>
    %358 = arith.addf %357, %356 : vector<8x64xf32>
    %359 = arith.mulf %348, %358 : vector<8x64xf32>
    %c1_150 = arith.constant 1 : index
    %c0_151 = arith.constant 0 : index
    %c0_152 = arith.constant 0 : index
    %360 = vector.load %arg13[%c1_150, %c0_151, %c0_152] : memref<2x64x32xf32, #tpu.memory_space<vmem>>, vector<1x64x32xf32>
    %361 = vector.shape_cast %360 : vector<1x64x32xf32> to vector<64x32xf32>
    %cst_153 = arith.constant dense<0.000000e+00> : vector<8x32xf32>
    %362 = tpu.matmul %359, %361, %cst_153 {dimension_numbers = #tpu.dot_dimension_numbers<[1], [0], [0], [1], [0, 0, 1, 1], [], []>} : vector<8x64xf32>, vector<64x32xf32>, vector<8x32xf32> -> vector<8x32xf32>
    %c1_154 = arith.constant 1 : index
    %c0_155 = arith.constant 0 : index
    %c0_156 = arith.constant 0 : index
    %363 = vector.load %arg14[%c1_154, %c0_155, %c0_156] : memref<2x1x32xf32, #tpu.memory_space<vmem>>, vector<1x1x32xf32>
    %364 = vector.shape_cast %363 : vector<1x1x32xf32> to vector<1x32xf32>
    %365 = vector.broadcast %364 : vector<1x32xf32> to vector<8x32xf32>
    %366 = arith.addf %362, %365 : vector<8x32xf32>
    %367 = arith.addf %339, %366 : vector<8x32xf32>
    %c1_157 = arith.constant 1 : index
    %c0_158 = arith.constant 0 : index
    %c0_159 = arith.constant 0 : index
    %368 = vector.load %arg15[%c1_157, %c0_158, %c0_159] : memref<2x1x32xf32, #tpu.memory_space<vmem>>, vector<1x1x32xf32>
    %369 = vector.shape_cast %368 : vector<1x1x32xf32> to vector<1x32xf32>
    %c1_160 = arith.constant 1 : index
    %c0_161 = arith.constant 0 : index
    %c0_162 = arith.constant 0 : index
    %370 = vector.load %arg16[%c1_160, %c0_161, %c0_162] : memref<2x1x32xf32, #tpu.memory_space<vmem>>, vector<1x1x32xf32>
    %371 = vector.shape_cast %370 : vector<1x1x32xf32> to vector<1x32xf32>
    %cst_163 = arith.constant dense<0.000000e+00> : vector<8xf32>
    %372 = vector.multi_reduction <add>, %367, %cst_163 [1] : vector<8x32xf32> to vector<8xf32>
    %373 = vector.shape_cast %372 : vector<8xf32> to vector<8x1xf32>
    %cst_164 = arith.constant 3.200000e+01 : f32
    %374 = vector.broadcast %cst_164 : f32 to vector<8x1xf32>
    %375 = arith.divf %373, %374 : vector<8x1xf32>
    %376 = vector.broadcast %375 : vector<8x1xf32> to vector<8x32xf32>
    %377 = arith.subf %367, %376 : vector<8x32xf32>
    %378 = arith.mulf %377, %377 : vector<8x32xf32>
    %cst_165 = arith.constant dense<0.000000e+00> : vector<8xf32>
    %379 = vector.multi_reduction <add>, %378, %cst_165 [1] : vector<8x32xf32> to vector<8xf32>
    %380 = vector.shape_cast %379 : vector<8xf32> to vector<8x1xf32>
    %cst_166 = arith.constant 3.200000e+01 : f32
    %381 = vector.broadcast %cst_166 : f32 to vector<8x1xf32>
    %382 = arith.divf %380, %381 : vector<8x1xf32>
    %383 = vector.broadcast %375 : vector<8x1xf32> to vector<8x32xf32>
    %384 = arith.subf %367, %383 : vector<8x32xf32>
    %cst_167 = arith.constant 9.99999996E-13 : f32
    %385 = vector.broadcast %cst_167 : f32 to vector<8x1xf32>
    %386 = arith.addf %382, %385 : vector<8x1xf32>
    %387 = math.rsqrt %386 : vector<8x1xf32>
    %388 = vector.broadcast %387 : vector<8x1xf32> to vector<8x32xf32>
    %389 = arith.mulf %384, %388 : vector<8x32xf32>
    %390 = vector.broadcast %369 : vector<1x32xf32> to vector<8x32xf32>
    %391 = arith.mulf %389, %390 : vector<8x32xf32>
    %392 = vector.broadcast %371 : vector<1x32xf32> to vector<8x32xf32>
    %393 = arith.addf %391, %392 : vector<8x32xf32>
    %c0_168 = arith.constant 0 : index
    %c0_169 = arith.constant 0 : index
    %394 = vector.load %arg17[%c0_168, %c0_169] : memref<1x32xf32, #tpu.memory_space<vmem>>, vector<1x32xf32>
    %c0_170 = arith.constant 0 : index
    %c0_171 = arith.constant 0 : index
    %395 = vector.load %arg18[%c0_170, %c0_171] : memref<1x32xf32, #tpu.memory_space<vmem>>, vector<1x32xf32>
    %cst_172 = arith.constant dense<0.000000e+00> : vector<8xf32>
    %396 = vector.multi_reduction <add>, %393, %cst_172 [1] : vector<8x32xf32> to vector<8xf32>
    %397 = vector.shape_cast %396 : vector<8xf32> to vector<8x1xf32>
    %cst_173 = arith.constant 3.200000e+01 : f32
    %398 = vector.broadcast %cst_173 : f32 to vector<8x1xf32>
    %399 = arith.divf %397, %398 : vector<8x1xf32>
    %400 = vector.broadcast %399 : vector<8x1xf32> to vector<8x32xf32>
    %401 = arith.subf %393, %400 : vector<8x32xf32>
    %402 = arith.mulf %401, %401 : vector<8x32xf32>
    %cst_174 = arith.constant dense<0.000000e+00> : vector<8xf32>
    %403 = vector.multi_reduction <add>, %402, %cst_174 [1] : vector<8x32xf32> to vector<8xf32>
    %404 = vector.shape_cast %403 : vector<8xf32> to vector<8x1xf32>
    %cst_175 = arith.constant 3.200000e+01 : f32
    %405 = vector.broadcast %cst_175 : f32 to vector<8x1xf32>
    %406 = arith.divf %404, %405 : vector<8x1xf32>
    %407 = vector.broadcast %399 : vector<8x1xf32> to vector<8x32xf32>
    %408 = arith.subf %393, %407 : vector<8x32xf32>
    %cst_176 = arith.constant 9.99999974E-6 : f32
    %409 = vector.broadcast %cst_176 : f32 to vector<8x1xf32>
    %410 = arith.addf %406, %409 : vector<8x1xf32>
    %411 = math.rsqrt %410 : vector<8x1xf32>
    %412 = vector.broadcast %411 : vector<8x1xf32> to vector<8x32xf32>
    %413 = arith.mulf %408, %412 : vector<8x32xf32>
    %414 = vector.broadcast %394 : vector<1x32xf32> to vector<8x32xf32>
    %415 = arith.mulf %413, %414 : vector<8x32xf32>
    %416 = vector.broadcast %395 : vector<1x32xf32> to vector<8x32xf32>
    %417 = arith.addf %415, %416 : vector<8x32xf32>
    %c0_177 = arith.constant 0 : index
    %c0_178 = arith.constant 0 : index
    %418 = vector.load %arg19[%c0_177, %c0_178] : memref<32x128xf32, #tpu.memory_space<vmem>>, vector<32x128xf32>
    %cst_179 = arith.constant dense<0.000000e+00> : vector<8x128xf32>
    %419 = tpu.matmul %417, %418, %cst_179 {dimension_numbers = #tpu.dot_dimension_numbers<[1], [0], [0], [1], [0, 0, 1, 1], [], []>} : vector<8x32xf32>, vector<32x128xf32>, vector<8x128xf32> -> vector<8x128xf32>
    %c0_180 = arith.constant 0 : index
    %c0_181 = arith.constant 0 : index
    %420 = vector.load %arg20[%c0_180, %c0_181] : memref<1x128xf32, #tpu.memory_space<vmem>>, vector<1x128xf32>
    %421 = vector.broadcast %420 : vector<1x128xf32> to vector<8x128xf32>
    %422 = arith.addf %419, %421 : vector<8x128xf32>
    %c0_182 = arith.constant 0 : index
    %c0_183 = arith.constant 0 : index
    %c0_184 = arith.constant 0 : index
    %423 = vector.load %arg21[%c0_182, %c0_183, %c0_184] : memref<1x8x128xf32, #tpu.memory_space<vmem>>, vector<1x8x128xf32>
    %424 = vector.shape_cast %423 : vector<1x8x128xf32> to vector<8x128xf32>
    %425 = vector.shape_cast %422 : vector<8x128xf32> to vector<1x8x128xf32>
    tpu.vector_store %arg21[%c0_182, %c0_183, %c0_184], %425 {strides = array<i32>} : memref<1x8x128xf32, #tpu.memory_space<vmem>>, vector<1x8x128xf32>,
    return
  }
  func.func @transform_0(%arg0: i32) -> (i32, i32, i32) {
    %c0_i32 = arith.constant 0 : i32
    %c0_i32_0 = arith.constant 0 : i32
    %c0_i32_1 = arith.constant 0 : i32
    return %arg0, %c0_i32, %c0_i32_0 : i32, i32, i32
  }
  func.func @transform_1(%arg0: i32) -> (i32, i32, i32) {
    %c0_i32 = arith.constant 0 : i32
    %c0_i32_0 = arith.constant 0 : i32
    %c0_i32_1 = arith.constant 0 : i32
    return %arg0, %c0_i32, %c0_i32_0 : i32, i32, i32
  }
  func.func @transform_2(%arg0: i32) -> (i32, i32) {
    %c0_i32 = arith.constant 0 : i32
    %c0_i32_0 = arith.constant 0 : i32
    %c0_i32_1 = arith.constant 0 : i32
    return %c0_i32, %c0_i32_0 : i32, i32
  }
  func.func @transform_3(%arg0: i32) -> (i32, i32) {
    %c0_i32 = arith.constant 0 : i32
    %c0_i32_0 = arith.constant 0 : i32
    %c0_i32_1 = arith.constant 0 : i32
    return %c0_i32, %c0_i32_0 : i32, i32
  }
  func.func @transform_4(%arg0: i32) -> (i32, i32, i32) {
    %c0_i32 = arith.constant 0 : i32
    %c0_i32_0 = arith.constant 0 : i32
    %c0_i32_1 = arith.constant 0 : i32
    %c0_i32_2 = arith.constant 0 : i32
    return %c0_i32, %c0_i32_0, %c0_i32_1 : i32, i32, i32
  }
  func.func @transform_5(%arg0: i32) -> (i32, i32, i32) {
    %c0_i32 = arith.constant 0 : i32
    %c0_i32_0 = arith.constant 0 : i32
    %c0_i32_1 = arith.constant 0 : i32
    %c0_i32_2 = arith.constant 0 : i32
    return %c0_i32, %c0_i32_0, %c0_i32_1 : i32, i32, i32
  }
  func.func @transform_6(%arg0: i32) -> (i32, i32, i32) {
    %c0_i32 = arith.constant 0 : i32
    %c0_i32_0 = arith.constant 0 : i32
    %c0_i32_1 = arith.constant 0 : i32
    %c0_i32_2 = arith.constant 0 : i32
    return %c0_i32, %c0_i32_0, %c0_i32_1 : i32, i32, i32
  }
  func.func @transform_7(%arg0: i32) -> (i32, i32, i32) {
    %c0_i32 = arith.constant 0 : i32
    %c0_i32_0 = arith.constant 0 : i32
    %c0_i32_1 = arith.constant 0 : i32
    %c0_i32_2 = arith.constant 0 : i32
    return %c0_i32, %c0_i32_0, %c0_i32_1 : i32, i32, i32
  }
  func.func @transform_8(%arg0: i32) -> (i32, i32, i32) {
    %c0_i32 = arith.constant 0 : i32
    %c0_i32_0 = arith.constant 0 : i32
    %c0_i32_1 = arith.constant 0 : i32
    %c0_i32_2 = arith.constant 0 : i32
    return %c0_i32, %c0_i32_0, %c0_i32_1 : i32, i32, i32
  }
  func.func @transform_9(%arg0: i32) -> (i32, i32, i32) {
    %c0_i32 = arith.constant 0 : i32
    %c0_i32_0 = arith.constant 0 : i32
    %c0_i32_1 = arith.constant 0 : i32
    %c0_i32_2 = arith.constant 0 : i32
    return %c0_i32, %c0_i32_0, %c0_i32_1 : i32, i32, i32
  }
  func.func @transform_10(%arg0: i32) -> (i32, i32, i32) {
    %c0_i32 = arith.constant 0 : i32
    %c0_i32_0 = arith.constant 0 : i32
    %c0_i32_1 = arith.constant 0 : i32
    %c0_i32_2 = arith.constant 0 : i32
    return %c0_i32, %c0_i32_0, %c0_i32_1 : i32, i32, i32
  }
  func.func @transform_11(%arg0: i32) -> (i32, i32, i32) {
    %c0_i32 = arith.constant 0 : i32
    %c0_i32_0 = arith.constant 0 : i32
    %c0_i32_1 = arith.constant 0 : i32
    %c0_i32_2 = arith.constant 0 : i32
    return %c0_i32, %c0_i32_0, %c0_i32_1 : i32, i32, i32
  }
  func.func @transform_12(%arg0: i32) -> (i32, i32, i32) {
    %c0_i32 = arith.constant 0 : i32
    %c0_i32_0 = arith.constant 0 : i32
    %c0_i32_1 = arith.constant 0 : i32
    %c0_i32_2 = arith.constant 0 : i32
    return %c0_i32, %c0_i32_0, %c0_i32_1 : i32, i32, i32
  }
  func.func @transform_13(%arg0: i32) -> (i32, i32, i32) {
    %c0_i32 = arith.constant 0 : i32
    %c0_i32_0 = arith.constant 0 : i32
    %c0_i32_1 = arith.constant 0 : i32
    %c0_i32_2 = arith.constant 0 : i32
    return %c0_i32, %c0_i32_0, %c0_i32_1 : i32, i32, i32
  }
  func.func @transform_14(%arg0: i32) -> (i32, i32, i32) {
    %c0_i32 = arith.constant 0 : i32
    %c0_i32_0 = arith.constant 0 : i32
    %c0_i32_1 = arith.constant 0 : i32
    %c0_i32_2 = arith.constant 0 : i32
    return %c0_i32, %c0_i32_0, %c0_i32_1 : i32, i32, i32
  }
  func.func @transform_15(%arg0: i32) -> (i32, i32, i32) {
    %c0_i32 = arith.constant 0 : i32
    %c0_i32_0 = arith.constant 0 : i32
    %c0_i32_1 = arith.constant 0 : i32
    %c0_i32_2 = arith.constant 0 : i32
    return %c0_i32, %c0_i32_0, %c0_i32_1 : i32, i32, i32
  }
  func.func @transform_16(%arg0: i32) -> (i32, i32) {
    %c0_i32 = arith.constant 0 : i32
    %c0_i32_0 = arith.constant 0 : i32
    %c0_i32_1 = arith.constant 0 : i32
    return %c0_i32, %c0_i32_0 : i32, i32
  }
  func.func @transform_17(%arg0: i32) -> (i32, i32) {
    %c0_i32 = arith.constant 0 : i32
    %c0_i32_0 = arith.constant 0 : i32
    %c0_i32_1 = arith.constant 0 : i32
    return %c0_i32, %c0_i32_0 : i32, i32
  }
  func.func @transform_18(%arg0: i32) -> (i32, i32) {
    %c0_i32 = arith.constant 0 : i32
    %c0_i32_0 = arith.constant 0 : i32
    %c0_i32_1 = arith.constant 0 : i32
    return %c0_i32, %c0_i32_0 : i32, i32
  }
  func.func @transform_19(%arg0: i32) -> (i32, i32) {
    %c0_i32 = arith.constant 0 : i32
    %c0_i32_0 = arith.constant 0 : i32
    %c0_i32_1 = arith.constant 0 : i32
    return %c0_i32, %c0_i32_0 : i32, i32
  }
  func.func @transform_20(%arg0: i32) -> (i32, i32, i32) {
    %c0_i32 = arith.constant 0 : i32
    %c0_i32_0 = arith.constant 0 : i32
    %c0_i32_1 = arith.constant 0 : i32
    return %arg0, %c0_i32, %c0_i32_0 : i32, i32, i32
  }
}

</mosaic_0001>

<llo_original>
// kernel: tpu_custom_call.1
$region0: #{tpu_custom_call.1}
  #allocation0 [shape = 'u32[]', space=smem, size = 0x4, offset = 0x4, fixed_abs, tag = 'smem constant byte address 0x4 - core index']
  #allocation1 [shape = 'u32[72,128]{1,0:T(1,128)}', space=vmem, size = 0x9000, scoped, tag = 'internal scratch']
  %s0 = inlined_call_operand.hbm [shape: f32[2,8,32], index: 0, kind: input, shape index: {}]
  %s1 = inlined_call_operand.hbm [shape: f32[2,1,8], index: 1, kind: input, shape index: {}]
  %s2 = inlined_call_operand.hbm [shape: f32[1,32], index: 2, kind: input, shape index: {}]
  %s3 = inlined_call_operand.hbm [shape: f32[1,32], index: 3, kind: input, shape index: {}]
  %s4 = inlined_call_operand.vmem [shape: f32[2,32,96], index: 4, kind: input, shape index: {}]
  %s5 = inlined_call_operand.vmem [shape: f32[2,1,96], index: 5, kind: input, shape index: {}]
  %s6 = inlined_call_operand.vmem [shape: f32[2,32,32], index: 6, kind: input, shape index: {}]
  %s7 = inlined_call_operand.vmem [shape: f32[2,1,32], index: 7, kind: input, shape index: {}]
  %s8 = inlined_call_operand.hbm [shape: f32[2,1,32], index: 8, kind: input, shape index: {}]
  %s9 = inlined_call_operand.vmem [shape: f32[2,1,32], index: 9, kind: input, shape index: {}]
  %s10 = inlined_call_operand.vmem [shape: f32[2,32,64], index: 10, kind: input, shape index: {}]
  %s11 = inlined_call_operand.vmem [shape: f32[2,1,64], index: 11, kind: input, shape index: {}]
  %s12 = inlined_call_operand.vmem [shape: f32[2,64,32], index: 12, kind: input, shape index: {}]
  %s13 = inlined_call_operand.vmem [shape: f32[2,1,32], index: 13, kind: input, shape index: {}]
  %s14 = inlined_call_operand.hbm [shape: f32[2,1,32], index: 14, kind: input, shape index: {}]
  %s15 = inlined_call_operand.vmem [shape: f32[2,1,32], index: 15, kind: input, shape index: {}]
  %s16 = inlined_call_operand.vmem [shape: f32[1,32], index: 16, kind: input, shape index: {}]
  %s17 = inlined_call_operand.vmem [shape: f32[1,32], index: 17, kind: input, shape index: {}]
  %s18 = inlined_call_operand.hbm [shape: f32[32,128], index: 18, kind: input, shape index: {}]
  %s19 = inlined_call_operand.vmem [shape: f32[1,128], index: 19, kind: input, shape index: {}]
  %s20 = inlined_call_operand.hbm [shape: f32[2,8,128], index: 20, kind: output, shape index: {}]
  %s21 = sld [smem:[#allocation0]]
  $region141: #{tpu_custom_call.1} parent=0
    _
  %s23 = ssub.s32 1, %s21
  %s24 = scalar_select 0, %s23, %s21
  $region1: #{tpu_custom_call.1} parent=0
    #allocation2 [shape = 'u8[8192]{0}', space=vmem, size = 0x2000, scoped, tag = 'input window, operand 0']
    #allocation3 [shape = 's32[2]{0}', space=sflag, size = 0x8, scoped, tag = 'scoped memory for tpu_custom_call.1']
    #allocation4 [shape = 's32[2]{0}', space=sflag, size = 0x8, scoped, tag = 'scoped memory for tpu_custom_call.1']
    #allocation5 [shape = 'u8[1024]{0}', space=vmem, size = 0x400, scoped, tag = 'input window, operand 1']
    #allocation6 [shape = 's32[2]{0}', space=sflag, size = 0x8, scoped, tag = 'scoped memory for tpu_custom_call.1']
    #allocation7 [shape = 'u8[512]{0}', space=vmem, size = 0x400, scoped, tag = 'input window, operand 2, single buffered']
    #allocation8 [shape = 'u8[512]{0}', space=vmem, size = 0x400, scoped, tag = 'input window, operand 3, single buffered']
    #allocation9 [shape = 's32[1]{0}', space=sflag, size = 0x4, scoped, tag = 'scoped memory for tpu_custom_call.1']
    #allocation10 [shape = 'u8[1024]{0}', space=vmem, size = 0x400, scoped, tag = 'input window, operand 8, single buffered']
    #allocation11 [shape = 'u8[1024]{0}', space=vmem, size = 0x400, scoped, tag = 'input window, operand 14, single buffered']
    #allocation12 [shape = 's32[1]{0}', space=sflag, size = 0x4, scoped, tag = 'scoped memory for tpu_custom_call.1']
    #allocation13 [shape = 'u8[16384]{0}', space=vmem, size = 0x4000, scoped, tag = 'input window, operand 18, single buffered']
    #allocation14 [shape = 'u8[8192]{0}', space=vmem, size = 0x2000, scoped, tag = 'output window, operand 0']
    %25 = vsyncpa [#allocation3], 0
    %s26 = scalar_lea.sflag [#allocation3], 1
    %27 = vsyncpa %s26, 0
    %28 = vsyncpa [#allocation6], 0
    %s29 = scalar_lea.sflag [#allocation6], 1
    %30 = vsyncpa %s29, 0
    %31 = vsyncpa [#allocation9], 0
    %32 = vsyncpa [#allocation12], 0
    %33 = vsyncpa [#allocation4], 0
    %s34 = scalar_lea.sflag [#allocation4], 1
    %35 = vsyncpa %s34, 0
    loop: start=0, step=1, limit=4
    $region2: #{tpu_custom_call.1} parent=1 // loop_pre_header
      _
    $region3: #{tpu_custom_call.1} parent=1 // loop_header
      %s37 = sphi 0, %s41
      %p38 = scmp.ge.s32.totalorder %s37, 4
      %s47 = sphi 0, %s49
      %s50 = sphi 0, %s47
      %s51 = sphi 0, %s50
      %s67 = sphi 0, %s51
      %s73 = sphi 0, %s75
      %s76 = sphi 0, %s73
      %s77 = sphi 0, %s76
      %s93 = sphi 0, %s77
      %s97 = sphi 0, %s97
      %s99 = sphi 0, %s97
      %s100 = sphi 0, %s99
      %s114 = sphi 0, %s100
      %s118 = sphi 0, %s118
      %s120 = sphi 0, %s118
      %s121 = sphi 0, %s120
      %s135 = sphi 0, %s121
      %s139 = sphi 0, %s139
      %s141 = sphi 0, %s139
      %s142 = sphi 0, %s141
      %s156 = sphi 0, %s142
      %s160 = sphi 0, %s160
      %s162 = sphi 0, %s160
      %s163 = sphi 0, %s162
      %s177 = sphi 0, %s163
      %s181 = sphi 0, %s181
      %s183 = sphi 0, %s181
      %s184 = sphi 0, %s183
      %s198 = sphi 0, %s184
      %s202 = sphi 0, %s202
      %s204 = sphi 0, %s202
      %s205 = sphi 0, %s204
      %s219 = sphi 0, %s205
      %s223 = sphi 0, %s223
      %s225 = sphi 0, %s223
      %s226 = sphi 0, %s225
      %s240 = sphi 0, %s226
      %s244 = sphi 0, %s244
      %s246 = sphi 0, %s244
      %s247 = sphi 0, %s246
      %s261 = sphi 0, %s247
      %s265 = sphi 0, %s265
      %s267 = sphi 0, %s265
      %s268 = sphi 0, %s267
      %s282 = sphi 0, %s268
      %s286 = sphi 0, %s286
      %s288 = sphi 0, %s286
      %s289 = sphi 0, %s288
      %s303 = sphi 0, %s289
      %s307 = sphi 0, %s307
      %s309 = sphi 0, %s307
      %s310 = sphi 0, %s309
      %s324 = sphi 0, %s310
      %s328 = sphi 0, %s328
      %s330 = sphi 0, %s328
      %s331 = sphi 0, %s330
      %s345 = sphi 0, %s331
      %s349 = sphi 0, %s349
      %s351 = sphi 0, %s349
      %s352 = sphi 0, %s351
      %s366 = sphi 0, %s352
      %s370 = sphi 0, %s370
      %s372 = sphi 0, %s370
      %s373 = sphi 0, %s372
      %s387 = sphi 0, %s373
      %s391 = sphi 0, %s391
      %s393 = sphi 0, %s391
      %s394 = sphi 0, %s393
      %s408 = sphi 0, %s394
      %s412 = sphi 0, %s412
      %s414 = sphi 0, %s412
      %s415 = sphi 0, %s414
      %s429 = sphi 0, %s415
      %s433 = sphi 0, %s433
      %s435 = sphi 0, %s433
      %s436 = sphi 0, %s435
      %s450 = sphi 0, %s436
      %s454 = sphi 0, %s454
      %s456 = sphi 0, %s454
      %s457 = sphi 0, %s456
      %s471 = sphi 0, %s457
      %s477 = sphi 0, %s479
      %s480 = sphi 0, %s477
      %s481 = sphi 0, %s480
      %s497 = sphi 0, %s481
    $region4: #{tpu_custom_call.1} parent=1 // loop_header_branch
      %40 = sbr.rel (%p38) target = $region8
    $region5: #{tpu_custom_call.1} parent=1 // loop_body
      %s42 = ssub.s32 %s37, 1
      %s43 = ssub.s32 %s37, 2
      %s44 = sadd.s32 %s37, 1
      %s45 = ssub.s32 %s37, %s44
      %p46 = scmp.eq.s32.totalorder %s45, 0
      %s48 = sadd.s32 %s47, 1
      %s49 = scalar_select %p46, %s47, %s48
      %p52 = pneg %p46
      %p53 = scmp.eq.s32.totalorder %s37, 1
      %p54 = por %p52, %p53
      %p55 = scmp.ne.s32.totalorder %s47, %s50
      %p56 = scmp.eq.s32.totalorder %s37, 0
      %p57 = por %p55, %p56
      %p58 = scmp.ne.s32.totalorder %s47, %s50
      %p59 = scmp.eq.s32.totalorder %s42, 1
      %p60 = por %p58, %p59
      %p61 = scmp.ne.s32.totalorder %s50, %s51
      %p62 = scmp.eq.s32.totalorder %s42, 0
      %p63 = por %p61, %p62
      %p64 = scmp.ne.s32.totalorder %s50, %s51
      %p65 = scmp.eq.s32.totalorder %s43, 1
      %p66 = por %p64, %p65
      %p68 = scmp.ne.s32.totalorder %s51, %s67
      %p69 = scmp.eq.s32.totalorder %s43, 0
      %p70 = por %p68, %p69
      %s71 = ssub.s32 %s37, %s44
      %p72 = scmp.eq.s32.totalorder %s71, 0
      %s74 = sadd.s32 %s73, 1
      %s75 = scalar_select %p72, %s73, %s74
      %p78 = pneg %p72
      %p79 = scmp.eq.s32.totalorder %s37, 1
      %p80 = por %p78, %p79
      %p81 = scmp.ne.s32.totalorder %s73, %s76
      %p82 = scmp.eq.s32.totalorder %s37, 0
      %p83 = por %p81, %p82
      %p84 = scmp.ne.s32.totalorder %s73, %s76
      %p85 = scmp.eq.s32.totalorder %s42, 1
      %p86 = por %p84, %p85
      %p87 = scmp.ne.s32.totalorder %s76, %s77
      %p88 = scmp.eq.s32.totalorder %s42, 0
      %p89 = por %p87, %p88
      %p90 = scmp.ne.s32.totalorder %s76, %s77
      %p91 = scmp.eq.s32.totalorder %s43, 1
      %p92 = por %p90, %p91
      %p94 = scmp.ne.s32.totalorder %s77, %s93
      %p95 = scmp.eq.s32.totalorder %s43, 0
      %p96 = por %p94, %p95
      %s98 = sadd.s32 %s97, 1
      %p101 = scmp.eq.s32.totalorder %s37, 1
      %p102 = scmp.ne.s32.totalorder %s97, %s99
      %p103 = scmp.eq.s32.totalorder %s37, 0
      %p104 = por %p102, %p103
      %p105 = scmp.ne.s32.totalorder %s97, %s99
      %p106 = scmp.eq.s32.totalorder %s42, 1
      %p107 = por %p105, %p106
      %p108 = scmp.ne.s32.totalorder %s99, %s100
      %p109 = scmp.eq.s32.totalorder %s42, 0
      %p110 = por %p108, %p109
      %p111 = scmp.ne.s32.totalorder %s99, %s100
      %p112 = scmp.eq.s32.totalorder %s43, 1
      %p113 = por %p111, %p112
      %p115 = scmp.ne.s32.totalorder %s100, %s114
      %p116 = scmp.eq.s32.totalorder %s43, 0
      %p117 = por %p115, %p116
      %s119 = sadd.s32 %s118, 1
      %p122 = scmp.eq.s32.totalorder %s37, 1
      %p123 = scmp.ne.s32.totalorder %s118, %s120
      %p124 = scmp.eq.s32.totalorder %s37, 0
      %p125 = por %p123, %p124
      %p126 = scmp.ne.s32.totalorder %s118, %s120
      %p127 = scmp.eq.s32.totalorder %s42, 1
      %p128 = por %p126, %p127
      %p129 = scmp.ne.s32.totalorder %s120, %s121
      %p130 = scmp.eq.s32.totalorder %s42, 0
      %p131 = por %p129, %p130
      %p132 = scmp.ne.s32.totalorder %s120, %s121
      %p133 = scmp.eq.s32.totalorder %s43, 1
      %p134 = por %p132, %p133
      %p136 = scmp.ne.s32.totalorder %s121, %s135
      %p137 = scmp.eq.s32.totalorder %s43, 0
      %p138 = por %p136, %p137
      %s140 = sadd.s32 %s139, 1
      %p143 = scmp.eq.s32.totalorder %s37, 1
      %p144 = scmp.ne.s32.totalorder %s139, %s141
      %p145 = scmp.eq.s32.totalorder %s37, 0
      %p146 = por %p144, %p145
      %p147 = scmp.ne.s32.totalorder %s139, %s141
      %p148 = scmp.eq.s32.totalorder %s42, 1
      %p149 = por %p147, %p148
      %p150 = scmp.ne.s32.totalorder %s141, %s142
      %p151 = scmp.eq.s32.totalorder %s42, 0
      %p152 = por %p150, %p151
      %p153 = scmp.ne.s32.totalorder %s141, %s142
      %p154 = scmp.eq.s32.totalorder %s43, 1
      %p155 = por %p153, %p154
      %p157 = scmp.ne.s32.totalorder %s142, %s156
      %p158 = scmp.eq.s32.totalorder %s43, 0
      %p159 = por %p157, %p158
      %s161 = sadd.s32 %s160, 1
      %p164 = scmp.eq.s32.totalorder %s37, 1
      %p165 = scmp.ne.s32.totalorder %s160, %s162
      %p166 = scmp.eq.s32.totalorder %s37, 0
      %p167 = por %p165, %p166
      %p168 = scmp.ne.s32.totalorder %s160, %s162
      %p169 = scmp.eq.s32.totalorder %s42, 1
      %p170 = por %p168, %p169
      %p171 = scmp.ne.s32.totalorder %s162, %s163
      %p172 = scmp.eq.s32.totalorder %s42, 0
      %p173 = por %p171, %p172
      %p174 = scmp.ne.s32.totalorder %s162, %s163
      %p175 = scmp.eq.s32.totalorder %s43, 1
      %p176 = por %p174, %p175
      %p178 = scmp.ne.s32.totalorder %s163, %s177
      %p179 = scmp.eq.s32.totalorder %s43, 0
      %p180 = por %p178, %p179
      %s182 = sadd.s32 %s181, 1
      %p185 = scmp.eq.s32.totalorder %s37, 1
      %p186 = scmp.ne.s32.totalorder %s181, %s183
      %p187 = scmp.eq.s32.totalorder %s37, 0
      %p188 = por %p186, %p187
      %p189 = scmp.ne.s32.totalorder %s181, %s183
      %p190 = scmp.eq.s32.totalorder %s42, 1
      %p191 = por %p189, %p190
      %p192 = scmp.ne.s32.totalorder %s183, %s184
      %p193 = scmp.eq.s32.totalorder %s42, 0
      %p194 = por %p192, %p193
      %p195 = scmp.ne.s32.totalorder %s183, %s184
      %p196 = scmp.eq.s32.totalorder %s43, 1
      %p197 = por %p195, %p196
      %p199 = scmp.ne.s32.totalorder %s184, %s198
      %p200 = scmp.eq.s32.totalorder %s43, 0
      %p201 = por %p199, %p200
      %s203 = sadd.s32 %s202, 1
      %p206 = scmp.eq.s32.totalorder %s37, 1
      %p207 = scmp.ne.s32.totalorder %s202, %s204
      %p208 = scmp.eq.s32.totalorder %s37, 0
      %p209 = por %p207, %p208
      %p210 = scmp.ne.s32.totalorder %s202, %s204
      %p211 = scmp.eq.s32.totalorder %s42, 1
      %p212 = por %p210, %p211
      %p213 = scmp.ne.s32.totalorder %s204, %s205
      %p214 = scmp.eq.s32.totalorder %s42, 0
      %p215 = por %p213, %p214
      %p216 = scmp.ne.s32.totalorder %s204, %s205
      %p217 = scmp.eq.s32.totalorder %s43, 1
      %p218 = por %p216, %p217
      %p220 = scmp.ne.s32.totalorder %s205, %s219
      %p221 = scmp.eq.s32.totalorder %s43, 0
      %p222 = por %p220, %p221
      %s224 = sadd.s32 %s223, 1
      %p227 = scmp.eq.s32.totalorder %s37, 1
      %p228 = scmp.ne.s32.totalorder %s223, %s225
      %p229 = scmp.eq.s32.totalorder %s37, 0
      %p230 = por %p228, %p229
      %p231 = scmp.ne.s32.totalorder %s223, %s225
      %p232 = scmp.eq.s32.totalorder %s42, 1
      %p233 = por %p231, %p232
      %p234 = scmp.ne.s32.totalorder %s225, %s226
      %p235 = scmp.eq.s32.totalorder %s42, 0
      %p236 = por %p234, %p235
      %p237 = scmp.ne.s32.totalorder %s225, %s226
      %p238 = scmp.eq.s32.totalorder %s43, 1
      %p239 = por %p237, %p238
      %p241 = scmp.ne.s32.totalorder %s226, %s240
      %p242 = scmp.eq.s32.totalorder %s43, 0
      %p243 = por %p241, %p242
      %s245 = sadd.s32 %s244, 1
      %p248 = scmp.eq.s32.totalorder %s37, 1
      %p249 = scmp.ne.s32.totalorder %s244, %s246
      %p250 = scmp.eq.s32.totalorder %s37, 0
      %p251 = por %p249, %p250
      %p252 = scmp.ne.s32.totalorder %s244, %s246
      %p253 = scmp.eq.s32.totalorder %s42, 1
      %p254 = por %p252, %p253
      %p255 = scmp.ne.s32.totalorder %s246, %s247
      %p256 = scmp.eq.s32.totalorder %s42, 0
      %p257 = por %p255, %p256
      %p258 = scmp.ne.s32.totalorder %s246, %s247
      %p259 = scmp.eq.s32.totalorder %s43, 1
      %p260 = por %p258, %p259
      %p262 = scmp.ne.s32.totalorder %s247, %s261
      %p263 = scmp.eq.s32.totalorder %s43, 0
      %p264 = por %p262, %p263
      %s266 = sadd.s32 %s265, 1
      %p269 = scmp.eq.s32.totalorder %s37, 1
      %p270 = scmp.ne.s32.totalorder %s265, %s267
      %p271 = scmp.eq.s32.totalorder %s37, 0
      %p272 = por %p270, %p271
      %p273 = scmp.ne.s32.totalorder %s265, %s267
      %p274 = scmp.eq.s32.totalorder %s42, 1
      %p275 = por %p273, %p274
      %p276 = scmp.ne.s32.totalorder %s267, %s268
      %p277 = scmp.eq.s32.totalorder %s42, 0
      %p278 = por %p276, %p277
      %p279 = scmp.ne.s32.totalorder %s267, %s268
      %p280 = scmp.eq.s32.totalorder %s43, 1
      %p281 = por %p279, %p280
      %p283 = scmp.ne.s32.totalorder %s268, %s282
      %p284 = scmp.eq.s32.totalorder %s43, 0
      %p285 = por %p283, %p284
      %s287 = sadd.s32 %s286, 1
      %p290 = scmp.eq.s32.totalorder %s37, 1
      %p291 = scmp.ne.s32.totalorder %s286, %s288
      %p292 = scmp.eq.s32.totalorder %s37, 0
      %p293 = por %p291, %p292
      %p294 = scmp.ne.s32.totalorder %s286, %s288
      %p295 = scmp.eq.s32.totalorder %s42, 1
      %p296 = por %p294, %p295
      %p297 = scmp.ne.s32.totalorder %s288, %s289
      %p298 = scmp.eq.s32.totalorder %s42, 0
      %p299 = por %p297, %p298
      %p300 = scmp.ne.s32.totalorder %s288, %s289
      %p301 = scmp.eq.s32.totalorder %s43, 1
      %p302 = por %p300, %p301
      %p304 = scmp.ne.s32.totalorder %s289, %s303
      %p305 = scmp.eq.s32.totalorder %s43, 0
      %p306 = por %p304, %p305
      %s308 = sadd.s32 %s307, 1
      %p311 = scmp.eq.s32.totalorder %s37, 1
      %p312 = scmp.ne.s32.totalorder %s307, %s309
      %p313 = scmp.eq.s32.totalorder %s37, 0
      %p314 = por %p312, %p313
      %p315 = scmp.ne.s32.totalorder %s307, %s309
      %p316 = scmp.eq.s32.totalorder %s42, 1
      %p317 = por %p315, %p316
      %p318 = scmp.ne.s32.totalorder %s309, %s310
      %p319 = scmp.eq.s32.totalorder %s42, 0
      %p320 = por %p318, %p319
      %p321 = scmp.ne.s32.totalorder %s309, %s310
      %p322 = scmp.eq.s32.totalorder %s43, 1
      %p323 = por %p321, %p322
      %p325 = scmp.ne.s32.totalorder %s310, %s324
      %p326 = scmp.eq.s32.totalorder %s43, 0
      %p327 = por %p325, %p326
      %s329 = sadd.s32 %s328, 1
      %p332 = scmp.eq.s32.totalorder %s37, 1
      %p333 = scmp.ne.s32.totalorder %s328, %s330
      %p334 = scmp.eq.s32.totalorder %s37, 0
      %p335 = por %p333, %p334
      %p336 = scmp.ne.s32.totalorder %s328, %s330
      %p337 = scmp.eq.s32.totalorder %s42, 1
      %p338 = por %p336, %p337
      %p339 = scmp.ne.s32.totalorder %s330, %s331
      %p340 = scmp.eq.s32.totalorder %s42, 0
      %p341 = por %p339, %p340
      %p342 = scmp.ne.s32.totalorder %s330, %s331
      %p343 = scmp.eq.s32.totalorder %s43, 1
      %p344 = por %p342, %p343
      %p346 = scmp.ne.s32.totalorder %s331, %s345
      %p347 = scmp.eq.s32.totalorder %s43, 0
      %p348 = por %p346, %p347
      %s350 = sadd.s32 %s349, 1
      %p353 = scmp.eq.s32.totalorder %s37, 1
      %p354 = scmp.ne.s32.totalorder %s349, %s351
      %p355 = scmp.eq.s32.totalorder %s37, 0
      %p356 = por %p354, %p355
      %p357 = scmp.ne.s32.totalorder %s349, %s351
      %p358 = scmp.eq.s32.totalorder %s42, 1
      %p359 = por %p357, %p358
      %p360 = scmp.ne.s32.totalorder %s351, %s352
      %p361 = scmp.eq.s32.totalorder %s42, 0
      %p362 = por %p360, %p361
      %p363 = scmp.ne.s32.totalorder %s351, %s352
      %p364 = scmp.eq.s32.totalorder %s43, 1
      %p365 = por %p363, %p364
      %p367 = scmp.ne.s32.totalorder %s352, %s366
      %p368 = scmp.eq.s32.totalorder %s43, 0
      %p369 = por %p367, %p368
      %s371 = sadd.s32 %s370, 1
      %p374 = scmp.eq.s32.totalorder %s37, 1
      %p375 = scmp.ne.s32.totalorder %s370, %s372
      %p376 = scmp.eq.s32.totalorder %s37, 0
      %p377 = por %p375, %p376
      %p378 = scmp.ne.s32.totalorder %s370, %s372
      %p379 = scmp.eq.s32.totalorder %s42, 1
      %p380 = por %p378, %p379
      %p381 = scmp.ne.s32.totalorder %s372, %s373
      %p382 = scmp.eq.s32.totalorder %s42, 0
      %p383 = por %p381, %p382
      %p384 = scmp.ne.s32.totalorder %s372, %s373
      %p385 = scmp.eq.s32.totalorder %s43, 1
      %p386 = por %p384, %p385
      %p388 = scmp.ne.s32.totalorder %s373, %s387
      %p389 = scmp.eq.s32.totalorder %s43, 0
      %p390 = por %p388, %p389
      %s392 = sadd.s32 %s391, 1
      %p395 = scmp.eq.s32.totalorder %s37, 1
      %p396 = scmp.ne.s32.totalorder %s391, %s393
      %p397 = scmp.eq.s32.totalorder %s37, 0
      %p398 = por %p396, %p397
      %p399 = scmp.ne.s32.totalorder %s391, %s393
      %p400 = scmp.eq.s32.totalorder %s42, 1
      %p401 = por %p399, %p400
      %p402 = scmp.ne.s32.totalorder %s393, %s394
      %p403 = scmp.eq.s32.totalorder %s42, 0
      %p404 = por %p402, %p403
      %p405 = scmp.ne.s32.totalorder %s393, %s394
      %p406 = scmp.eq.s32.totalorder %s43, 1
      %p407 = por %p405, %p406
      %p409 = scmp.ne.s32.totalorder %s394, %s408
      %p410 = scmp.eq.s32.totalorder %s43, 0
      %p411 = por %p409, %p410
      %s413 = sadd.s32 %s412, 1
      %p416 = scmp.eq.s32.totalorder %s37, 1
      %p417 = scmp.ne.s32.totalorder %s412, %s414
      %p418 = scmp.eq.s32.totalorder %s37, 0
      %p419 = por %p417, %p418
      %p420 = scmp.ne.s32.totalorder %s412, %s414
      %p421 = scmp.eq.s32.totalorder %s42, 1
      %p422 = por %p420, %p421
      %p423 = scmp.ne.s32.totalorder %s414, %s415
      %p424 = scmp.eq.s32.totalorder %s42, 0
      %p425 = por %p423, %p424
      %p426 = scmp.ne.s32.totalorder %s414, %s415
      %p427 = scmp.eq.s32.totalorder %s43, 1
      %p428 = por %p426, %p427
      %p430 = scmp.ne.s32.totalorder %s415, %s429
      %p431 = scmp.eq.s32.totalorder %s43, 0
      %p432 = por %p430, %p431
      %s434 = sadd.s32 %s433, 1
      %p437 = scmp.eq.s32.totalorder %s37, 1
      %p438 = scmp.ne.s32.totalorder %s433, %s435
      %p439 = scmp.eq.s32.totalorder %s37, 0
      %p440 = por %p438, %p439
      %p441 = scmp.ne.s32.totalorder %s433, %s435
      %p442 = scmp.eq.s32.totalorder %s42, 1
      %p443 = por %p441, %p442
      %p444 = scmp.ne.s32.totalorder %s435, %s436
      %p445 = scmp.eq.s32.totalorder %s42, 0
      %p446 = por %p444, %p445
      %p447 = scmp.ne.s32.totalorder %s435, %s436
      %p448 = scmp.eq.s32.totalorder %s43, 1
      %p449 = por %p447, %p448
      %p451 = scmp.ne.s32.totalorder %s436, %s450
      %p452 = scmp.eq.s32.totalorder %s43, 0
      %p453 = por %p451, %p452
      %s455 = sadd.s32 %s454, 1
      %p458 = scmp.eq.s32.totalorder %s37, 1
      %p459 = scmp.ne.s32.totalorder %s454, %s456
      %p460 = scmp.eq.s32.totalorder %s37, 0
      %p461 = por %p459, %p460
      %p462 = scmp.ne.s32.totalorder %s454, %s456
      %p463 = scmp.eq.s32.totalorder %s42, 1
      %p464 = por %p462, %p463
      %p465 = scmp.ne.s32.totalorder %s456, %s457
      %p466 = scmp.eq.s32.totalorder %s42, 0
      %p467 = por %p465, %p466
      %p468 = scmp.ne.s32.totalorder %s456, %s457
      %p469 = scmp.eq.s32.totalorder %s43, 1
      %p470 = por %p468, %p469
      %p472 = scmp.ne.s32.totalorder %s457, %s471
      %p473 = scmp.eq.s32.totalorder %s43, 0
      %p474 = por %p472, %p473
      %s475 = ssub.s32 %s37, %s44
      %p476 = scmp.eq.s32.totalorder %s475, 0
      %s478 = sadd.s32 %s477, 1
      %s479 = scalar_select %p476, %s477, %s478
      %p482 = pneg %p476
      %p483 = scmp.eq.s32.totalorder %s37, 1
      %p484 = por %p482, %p483
      %p485 = scmp.ne.s32.totalorder %s477, %s480
      %p486 = scmp.eq.s32.totalorder %s37, 0
      %p487 = por %p485, %p486
      %p488 = scmp.ne.s32.totalorder %s477, %s480
      %p489 = scmp.eq.s32.totalorder %s42, 1
      %p490 = por %p488, %p489
      %p491 = scmp.ne.s32.totalorder %s480, %s481
      %p492 = scmp.eq.s32.totalorder %s42, 0
      %p493 = por %p491, %p492
      %p494 = scmp.ne.s32.totalorder %s480, %s481
      %p495 = scmp.eq.s32.totalorder %s43, 1
      %p496 = por %p494, %p495
      %p498 = scmp.ne.s32.totalorder %s481, %s497
      %p499 = scmp.eq.s32.totalorder %s43, 0
      %p500 = por %p498, %p499
      %p501 = scmp.le.s32.totalorder 1, %s37
      %p502 = scmp.lt.s32.totalorder %s37, 3
      %p503 = pnand %p501, %p502
      %p504 = pneg %p503
      // Predicated region
      $region9: #{tpu_custom_call.1} parent=5 // pred_check
        _
      $region10: #{tpu_custom_call.1} parent=5 // pred_check_branch
        %506 = sbr.rel (%p503) target = $region12
      $region11: #{tpu_custom_call.1} parent=5 // pred_region
        %s507 = ssub.s32 %s37, 1
        // Predicated region
        $region13: #{tpu_custom_call.1} parent=11 // pred_check
          %p508 = pneg %p110
        $region14: #{tpu_custom_call.1} parent=11 // pred_check_branch
          %510 = sbr.rel (%p508) target = $region16
        $region15: #{tpu_custom_call.1} parent=11 // pred_region
          %512 = vsyncadd [#allocation6], 0
          %s514 = sshll.u32 %s2, 4
          %s515 = int_to_ptr.hbm [resolvable:$true] %s514
          %s516 = sshll.u32 [#allocation7], 4
          %s517 = int_to_ptr.vmem [resolvable:$true] %s516
          %519 = dma.hbm_to_vmem [thread:$0]  %s515, 16, %s517, [#allocation6]
        $region16: #{tpu_custom_call.1} parent=11 // pred_fallthru
          _
        // Predicated region
        $region17: #{tpu_custom_call.1} parent=11 // pred_check
          %p520 = pneg %p131
        $region18: #{tpu_custom_call.1} parent=11 // pred_check_branch
          %522 = sbr.rel (%p520) target = $region20
        $region19: #{tpu_custom_call.1} parent=11 // pred_region
          %524 = vsyncadd [#allocation9], 0
          %s526 = sshll.u32 %s3, 4
          %s527 = int_to_ptr.hbm [resolvable:$true] %s526
          %s528 = sshll.u32 [#allocation8], 4
          %s529 = int_to_ptr.vmem [resolvable:$true] %s528
          %531 = dma.hbm_to_vmem [thread:$0]  %s527, 16, %s529, [#allocation9]
        $region20: #{tpu_custom_call.1} parent=11 // pred_fallthru
          _
        // Predicated region
        $region21: #{tpu_custom_call.1} parent=11 // pred_check
          %p532 = pneg %p152
        $region22: #{tpu_custom_call.1} parent=11 // pred_check_branch
          %534 = sbr.rel (%p532) target = $region24
        $region23: #{tpu_custom_call.1} parent=11 // pred_region
          _
        $region24: #{tpu_custom_call.1} parent=11 // pred_fallthru
          _
        // Predicated region
        $region25: #{tpu_custom_call.1} parent=11 // pred_check
          %p535 = pneg %p173
        $region26: #{tpu_custom_call.1} parent=11 // pred_check_branch
          %537 = sbr.rel (%p535) target = $region28
        $region27: #{tpu_custom_call.1} parent=11 // pred_region
          _
        $region28: #{tpu_custom_call.1} parent=11 // pred_fallthru
          _
        // Predicated region
        $region29: #{tpu_custom_call.1} parent=11 // pred_check
          %p538 = pneg %p194
        $region30: #{tpu_custom_call.1} parent=11 // pred_check_branch
          %540 = sbr.rel (%p538) target = $region32
        $region31: #{tpu_custom_call.1} parent=11 // pred_region
          _
        $region32: #{tpu_custom_call.1} parent=11 // pred_fallthru
          _
        // Predicated region
        $region33: #{tpu_custom_call.1} parent=11 // pred_check
          %p541 = pneg %p215
        $region34: #{tpu_custom_call.1} parent=11 // pred_check_branch
          %543 = sbr.rel (%p541) target = $region36
        $region35: #{tpu_custom_call.1} parent=11 // pred_region
          _
        $region36: #{tpu_custom_call.1} parent=11 // pred_fallthru
          _
        // Predicated region
        $region37: #{tpu_custom_call.1} parent=11 // pred_check
          %p544 = pneg %p236
        $region38: #{tpu_custom_call.1} parent=11 // pred_check_branch
          %546 = sbr.rel (%p544) target = $region40
        $region39: #{tpu_custom_call.1} parent=11 // pred_region
          %548 = vsyncadd [#allocation9], 0
          %s549 = sshll.u32 %s8, 4
          %s550 = int_to_ptr.hbm [resolvable:$true] %s549
          %s551 = sshll.u32 [#allocation10], 4
          %s552 = int_to_ptr.vmem [resolvable:$true] %s551
          %557 = dma.hbm_to_vmem [thread:$0]  %s550, 32, %s552, [#allocation9], 16, 16, 1
        $region40: #{tpu_custom_call.1} parent=11 // pred_fallthru
          _
        // Predicated region
        $region41: #{tpu_custom_call.1} parent=11 // pred_check
          %p558 = pneg %p257
        $region42: #{tpu_custom_call.1} parent=11 // pred_check_branch
          %560 = sbr.rel (%p558) target = $region44
        $region43: #{tpu_custom_call.1} parent=11 // pred_region
          _
        $region44: #{tpu_custom_call.1} parent=11 // pred_fallthru
          _
        // Predicated region
        $region45: #{tpu_custom_call.1} parent=11 // pred_check
          %p561 = pneg %p278
        $region46: #{tpu_custom_call.1} parent=11 // pred_check_branch
          %563 = sbr.rel (%p561) target = $region48
        $region47: #{tpu_custom_call.1} parent=11 // pred_region
          _
        $region48: #{tpu_custom_call.1} parent=11 // pred_fallthru
          _
        // Predicated region
        $region49: #{tpu_custom_call.1} parent=11 // pred_check
          %p564 = pneg %p299
        $region50: #{tpu_custom_call.1} parent=11 // pred_check_branch
          %566 = sbr.rel (%p564) target = $region52
        $region51: #{tpu_custom_call.1} parent=11 // pred_region
          _
        $region52: #{tpu_custom_call.1} parent=11 // pred_fallthru
          _
        // Predicated region
        $region53: #{tpu_custom_call.1} parent=11 // pred_check
          %p567 = pneg %p320
        $region54: #{tpu_custom_call.1} parent=11 // pred_check_branch
          %569 = sbr.rel (%p567) target = $region56
        $region55: #{tpu_custom_call.1} parent=11 // pred_region
          _
        $region56: #{tpu_custom_call.1} parent=11 // pred_fallthru
          _
        // Predicated region
        $region57: #{tpu_custom_call.1} parent=11 // pred_check
          %p570 = pneg %p341
        $region58: #{tpu_custom_call.1} parent=11 // pred_check_branch
          %572 = sbr.rel (%p570) target = $region60
        $region59: #{tpu_custom_call.1} parent=11 // pred_region
          _
        $region60: #{tpu_custom_call.1} parent=11 // pred_fallthru
          _
        // Predicated region
        $region61: #{tpu_custom_call.1} parent=11 // pred_check
          %p573 = pneg %p362
        $region62: #{tpu_custom_call.1} parent=11 // pred_check_branch
          %575 = sbr.rel (%p573) target = $region64
        $region63: #{tpu_custom_call.1} parent=11 // pred_region
          %577 = vsyncadd [#allocation12], 0
          %s578 = sshll.u32 %s14, 4
          %s579 = int_to_ptr.hbm [resolvable:$true] %s578
          %s580 = sshll.u32 [#allocation11], 4
          %s581 = int_to_ptr.vmem [resolvable:$true] %s580
          %586 = dma.hbm_to_vmem [thread:$0]  %s579, 32, %s581, [#allocation12], 16, 16, 1
        $region64: #{tpu_custom_call.1} parent=11 // pred_fallthru
          _
        // Predicated region
        $region65: #{tpu_custom_call.1} parent=11 // pred_check
          %p587 = pneg %p383
        $region66: #{tpu_custom_call.1} parent=11 // pred_check_branch
          %589 = sbr.rel (%p587) target = $region68
        $region67: #{tpu_custom_call.1} parent=11 // pred_region
          _
        $region68: #{tpu_custom_call.1} parent=11 // pred_fallthru
          _
        // Predicated region
        $region69: #{tpu_custom_call.1} parent=11 // pred_check
          %p590 = pneg %p404
        $region70: #{tpu_custom_call.1} parent=11 // pred_check_branch
          %592 = sbr.rel (%p590) target = $region72
        $region71: #{tpu_custom_call.1} parent=11 // pred_region
          _
        $region72: #{tpu_custom_call.1} parent=11 // pred_fallthru
          _
        // Predicated region
        $region73: #{tpu_custom_call.1} parent=11 // pred_check
          %p593 = pneg %p425
        $region74: #{tpu_custom_call.1} parent=11 // pred_check_branch
          %595 = sbr.rel (%p593) target = $region76
        $region75: #{tpu_custom_call.1} parent=11 // pred_region
          _
        $region76: #{tpu_custom_call.1} parent=11 // pred_fallthru
          _
        // Predicated region
        $region77: #{tpu_custom_call.1} parent=11 // pred_check
          %p596 = pneg %p446
        $region78: #{tpu_custom_call.1} parent=11 // pred_check_branch
          %598 = sbr.rel (%p596) target = $region80
        $region79: #{tpu_custom_call.1} parent=11 // pred_region
          %600 = vsyncadd [#allocation12], 0
          %s601 = sshll.u32 %s18, 4
          %s602 = int_to_ptr.hbm [resolvable:$true] %s601
          %s603 = sshll.u32 [#allocation13], 4
          %s604 = int_to_ptr.vmem [resolvable:$true] %s603
          %609 = dma.hbm_to_vmem [thread:$0]  %s602, 512, %s604, [#allocation12], 128, 128, 8
        $region80: #{tpu_custom_call.1} parent=11 // pred_fallthru
          _
        // Predicated region
        $region81: #{tpu_custom_call.1} parent=11 // pred_check
          %p610 = pneg %p467
        $region82: #{tpu_custom_call.1} parent=11 // pred_check_branch
          %612 = sbr.rel (%p610) target = $region84
        $region83: #{tpu_custom_call.1} parent=11 // pred_region
          _
        $region84: #{tpu_custom_call.1} parent=11 // pred_fallthru
          _
      $region12: #{tpu_custom_call.1} parent=5 // pred_fallthru
        _
      %p613 = scmp.lt.s32.totalorder %s37, 2
      // Predicated region
      $region85: #{tpu_custom_call.1} parent=5 // pred_check
        %p614 = pneg %p613
      $region86: #{tpu_custom_call.1} parent=5 // pred_check_branch
        %616 = sbr.rel (%p614) target = $region88
      $region87: #{tpu_custom_call.1} parent=5 // pred_region
        // Predicated region
        $region89: #{tpu_custom_call.1} parent=87 // pred_check
          %p617 = pneg %p57
        $region90: #{tpu_custom_call.1} parent=87 // pred_check_branch
          %619 = sbr.rel (%p617) target = $region92
        $region91: #{tpu_custom_call.1} parent=87 // pred_region
          %s620 = sand.u32 %s47, 1
          %s621 = scalar_lea.sflag [#allocation3], %s620
          %s622 = sand.u32 %s47, 1
          %s623 = smul.addr %s622, 8
          %s624 = scalar_lea.vmem [#allocation2], %s623
          %626 = vsyncadd %s621, 0
          %s627 = smul.addr %s37, 8
          %s628 = scalar_lea.hbm %s0, %s627
          %s630 = sshll.u32 %s628, 4
          %s631 = int_to_ptr.hbm [resolvable:$true] %s630
          %s632 = sshll.u32 %s624, 4
          %s633 = int_to_ptr.vmem [resolvable:$true] %s632
          %635 = dma.hbm_to_vmem [thread:$0]  %s631, 128, %s633, %s621
        $region92: #{tpu_custom_call.1} parent=87 // pred_fallthru
          _
        // Predicated region
        $region93: #{tpu_custom_call.1} parent=87 // pred_check
          %p636 = pneg %p83
        $region94: #{tpu_custom_call.1} parent=87 // pred_check_branch
          %638 = sbr.rel (%p636) target = $region96
        $region95: #{tpu_custom_call.1} parent=87 // pred_region
          %s639 = sand.u32 %s37, 1
          %s640 = scalar_lea.sflag [#allocation6], %s639
          %s641 = sand.u32 %s73, 1
          %s642 = scalar_lea.vmem [#allocation5], %s641
          %644 = vsyncadd %s640, 0
          %s645 = scalar_lea.hbm %s1, %s37
          %s647 = sshll.u32 %s645, 4
          %s648 = int_to_ptr.hbm [resolvable:$true] %s647
          %s649 = sshll.u32 %s642, 4
          %s650 = int_to_ptr.vmem [resolvable:$true] %s649
          %652 = dma.hbm_to_vmem [thread:$0]  %s648, 16, %s650, %s640
        $region96: #{tpu_custom_call.1} parent=87 // pred_fallthru
          _
      $region88: #{tpu_custom_call.1} parent=5 // pred_fallthru
        _
      %p653 = scmp.le.s32.totalorder 1, %s37
      %p654 = scmp.lt.s32.totalorder %s37, 3
      %p655 = pnand %p653, %p654
      %p656 = pneg %p655
      // Predicated region
      $region97: #{tpu_custom_call.1} parent=5 // pred_check
        _
      $region98: #{tpu_custom_call.1} parent=5 // pred_check_branch
        %658 = sbr.rel (%p655) target = $region100
      $region99: #{tpu_custom_call.1} parent=5 // pred_region
        %s659 = ssub.s32 %s37, 1
        %s660 = sand.u32 %s50, 1
        %s661 = scalar_lea.sflag [#allocation3], %s660
        %s662 = sand.u32 %s50, 1
        %s663 = smul.addr %s662, 8
        %s664 = scalar_lea.vmem [#allocation2], %s663
        // Predicated region
        $region101: #{tpu_custom_call.1} parent=99 // pred_check
          %p665 = pneg %p63
        $region102: #{tpu_custom_call.1} parent=99 // pred_check_branch
          %667 = sbr.rel (%p665) target = $region104
        $region103: #{tpu_custom_call.1} parent=99 // pred_region
          %669 = dma.done %s661, 128
        $region104: #{tpu_custom_call.1} parent=99 // pred_fallthru
          _
        %s670 = sand.u32 %s42, 1
        %s671 = scalar_lea.sflag [#allocation6], %s670
        %s672 = sand.u32 %s76, 1
        %s673 = scalar_lea.vmem [#allocation5], %s672
        // Predicated region
        $region105: #{tpu_custom_call.1} parent=99 // pred_check
          %p674 = pneg %p89
        $region106: #{tpu_custom_call.1} parent=99 // pred_check_branch
          %676 = sbr.rel (%p674) target = $region108
        $region107: #{tpu_custom_call.1} parent=99 // pred_region
          %678 = dma.done %s671, 16
        $region108: #{tpu_custom_call.1} parent=99 // pred_fallthru
          _
        // Predicated region
        $region109: #{tpu_custom_call.1} parent=99 // pred_check
          %p679 = pneg %p110
        $region110: #{tpu_custom_call.1} parent=99 // pred_check_branch
          %681 = sbr.rel (%p679) target = $region112
        $region111: #{tpu_custom_call.1} parent=99 // pred_region
          %683 = dma.done [#allocation6], 16
        $region112: #{tpu_custom_call.1} parent=99 // pred_fallthru
          _
        // Predicated region
        $region113: #{tpu_custom_call.1} parent=99 // pred_check
          %p684 = pneg %p131
        $region114: #{tpu_custom_call.1} parent=99 // pred_check_branch
          %686 = sbr.rel (%p684) target = $region116
        $region115: #{tpu_custom_call.1} parent=99 // pred_region
          %688 = dma.done [#allocation9], 16
        $region116: #{tpu_custom_call.1} parent=99 // pred_fallthru
          _
        // Predicated region
        $region117: #{tpu_custom_call.1} parent=99 // pred_check
          %p689 = pneg %p236
        $region118: #{tpu_custom_call.1} parent=99 // pred_check_branch
          %691 = sbr.rel (%p689) target = $region120
        $region119: #{tpu_custom_call.1} parent=99 // pred_region
          %693 = dma.done [#allocation9], 32
        $region120: #{tpu_custom_call.1} parent=99 // pred_fallthru
          _
        // Predicated region
        $region121: #{tpu_custom_call.1} parent=99 // pred_check
          %p694 = pneg %p362
        $region122: #{tpu_custom_call.1} parent=99 // pred_check_branch
          %696 = sbr.rel (%p694) target = $region124
        $region123: #{tpu_custom_call.1} parent=99 // pred_region
          %698 = dma.done [#allocation12], 32
        $region124: #{tpu_custom_call.1} parent=99 // pred_fallthru
          _
        // Predicated region
        $region125: #{tpu_custom_call.1} parent=99 // pred_check
          %p699 = pneg %p446
        $region126: #{tpu_custom_call.1} parent=99 // pred_check_branch
          %701 = sbr.rel (%p699) target = $region128
        $region127: #{tpu_custom_call.1} parent=99 // pred_region
          %703 = dma.done [#allocation12], 512
        $region128: #{tpu_custom_call.1} parent=99 // pred_fallthru
          _
        %s704 = sand.u32 %s50, 1
        %s705 = scalar_lea.sflag [#allocation3], %s704
        %s706 = sand.u32 %s50, 1
        %s707 = smul.addr %s706, 8
        %s708 = scalar_lea.vmem [#allocation2], %s707
        %p709 = pneg %p63
        %p710 = pneg %p60
        %s711 = sand.u32 %s42, 1
        %s712 = scalar_lea.sflag [#allocation6], %s711
        %s713 = sand.u32 %s76, 1
        %s714 = scalar_lea.vmem [#allocation5], %s713
        %p715 = pneg %p89
        %p716 = pneg %p86
        %p717 = pneg %p110
        %p718 = pneg %p107
        %p719 = pneg %p131
        %p720 = pneg %p128
        %p721 = pneg %p152
        %p722 = pneg %p149
        %p723 = pneg %p173
        %p724 = pneg %p170
        %p725 = pneg %p194
        %p726 = pneg %p191
        %p727 = pneg %p215
        %p728 = pneg %p212
        %p729 = pneg %p236
        %p730 = pneg %p233
        %p731 = pneg %p257
        %p732 = pneg %p254
        %p733 = pneg %p278
        %p734 = pneg %p275
        %p735 = pneg %p299
        %p736 = pneg %p296
        %p737 = pneg %p320
        %p738 = pneg %p317
        %p739 = pneg %p341
        %p740 = pneg %p338
        %p741 = pneg %p362
        %p742 = pneg %p359
        %p743 = pneg %p383
        %p744 = pneg %p380
        %p745 = pneg %p404
        %p746 = pneg %p401
        %p747 = pneg %p425
        %p748 = pneg %p422
        %p749 = pneg %p446
        %p750 = pneg %p443
        %p751 = pneg %p467
        %p752 = pneg %p464
        %p753 = pneg %p493
        %p754 = pneg %p490
        %s755 = sand.u32 %s480, 1
        %s756 = scalar_lea.sflag [#allocation4], %s755
        %s757 = sand.u32 %s480, 1
        %s758 = smul.addr %s757, 8
        %s759 = scalar_lea.vmem [#allocation14], %s758
        %v760 = vld [vmem:[%s664] sm:$0xff]
        %v761 = vld [vmem:[#allocation7] sm:$0x1]
        %v762 = vld [vmem:[#allocation8] sm:$0x1]
        %vm763 = vcmask 261120
        %v764 = vsel %vm763, %v760, 0.0
        %765 = vadd.xlane.f32.xlu0 %v764
        %v766 = vpop.xlane.xlu0 %765
        %v767 = vrcp.pop 32.0
        %v768 = vmul.f32 32.0, %v767
        %v769 = vsub.f32 1.0, %v768
        %v770 = vmul.f32 %v767, %v769
        %v771 = vadd.f32 %v767, %v770
        %vm772 = vweird.f32 %v767
        %v773 = vsel %vm772, %v767, %v771
        %v774 = vmul.f32 %v766, %v773
        %v775 = vsub.f32 %v760, %v774
        %v776 = vmul.f32 %v775, %v775
        %v777 = vsel %vm763, %v776, 0.0
        %778 = vadd.xlane.f32.xlu0 %v777
        %v779 = vpop.xlane.xlu0 %778
        %v780 = vmul.f32 %v779, %v773
        %v781 = vadd.f32 %v780, 1e-12
        %v782 = vrsqrt.pop %v781
        %v783 = vmul.f32 %v782, %v781
        %v784 = vmul.f32 %v783, %v782
        %v785 = vmul.f32 0.5, %v784
        %v786 = vsub.f32 1.5, %v785
        %v787 = vmul.f32 %v782, %v786
        %vm788 = vweird.f32 %v781
        %vm789 = vweird.f32 %v782
        %vm790 = vmor %vm788, %vm789
        %v791 = vsel %vm790, %v782, %v787
        %v792 = vmul.f32 %v775, %v791
        %v794 = vperm.slane %v761, 0
        %v796 = vmul.f32 %v792, %v794
        %v798 = vperm.slane %v762, 0
        %v800 = vadd.f32 %v796, %v798
        %v801 = vld [vmem:[%s673] sm:$0x1]
        %v802 = vld [vmem:[%s4] sm:$0xff]
        %v803 = vld [vmem:[%s4 + $0x8] sm:$0xff]
        %v804 = vld [vmem:[%s4 + $0x10] sm:$0xff]
        %v805 = vld [vmem:[%s4 + $0x18] sm:$0xff]
        %v806 = vld [vmem:[%s5] sm:$0x1]
        %v808 = vperm.slane %v806, 0
        %v811 = vsel %vm763, %v800, 0
        %813 = vmatpush.msra.mxu0 0.0
        %814 = vmatpush.msra.mxu0 0.0
        %815 = vmatpush.msra.mxu0 0.0
        %816 = vmatpush.msra.mxu0 0.0
        %817 = vmatpush.msra.mxu0 0.0
        %818 = vmatpush.msra.mxu0 0.0
        %819 = vmatpush.msra.mxu0 0.0
        %820 = vmatpush.msra.mxu0 0.0
        %821 = vmatpush.msra.mxu0 0.0
        %822 = vmatpush.msra.mxu0 0.0
        %823 = vmatpush.msra.mxu0 0.0
        %824 = vmatpush.msra.mxu0 0.0
        %825 = vmatpush.msra.mxu0 %v805
        %826 = vmatpush.msra.mxu0 %v804
        %827 = vmatpush.msra.mxu0 %v803
        %828 = vmatpush.msra.mxu0 %v802
        %829 = vmatmul.f32.gmra.mxu0 %v811
        %v830 = vpop.f32.mrf.mxu0
        %v831 = vadd.f32 %v808, %v830
        %832 = vdwg.mxu0
        %v833 = vld [vmem:[%s6] sm:$0xff]
        %v834 = vld [vmem:[%s6 + $0x8] sm:$0xff]
        %v835 = vld [vmem:[%s6 + $0x10] sm:$0xff]
        %v836 = vld [vmem:[%s6 + $0x18] sm:$0xff]
        %838 = vrot.lane.b32.xlu0 %v831, 96
        %v839 = vpop.permute.xlu0 %838
        %vm840 = vcmask 64512
        %v841 = vsel %vm840, %v831, 0
        %v843 = vsel %vm840, %v839, 0
        %845 = vmatpush.xpose.msra.mxu0 0.0
        %846 = vmatpush.xpose.msra.mxu0 0.0
        %847 = vmatpush.xpose.msra.mxu0 0.0
        %848 = vmatpush.xpose.msra.mxu0 0.0
        %849 = vmatpush.xpose.msra.mxu0 0.0
        %850 = vmatpush.xpose.msra.mxu0 0.0
        %851 = vmatpush.xpose.msra.mxu0 0.0
        %852 = vmatpush.xpose.msra.mxu0 0.0
        %853 = vmatpush.xpose.msra.mxu0 0.0
        %854 = vmatpush.xpose.msra.mxu0 0.0
        %855 = vmatpush.xpose.msra.mxu0 0.0
        %856 = vmatpush.xpose.msra.mxu0 0.0
        %857 = vmatpush.xpose.msra.mxu0 0.0
        %858 = vmatpush.xpose.msra.mxu0 0.0
        %859 = vmatpush.xpose.msra.mxu0 0.0
        %860 = vmatpush.xpose.msra.mxu0 %v843
        %861 = vmatmul.f32.gmra.mxu0 %v841
        %v862 = vpop.f32.mrf.mxu0
        %v863 = vadd.f32 0.0, %v862
        %864 = vdwg.mxu0
        %v865 = vmul.f32 %v863, 0.35355338
        %v867 = vperm.slane %v801, 0
        %v869 = vadd.f32 %v865, %v867
        %v870 = vsel %vm840, %v869, -inf
        %871 = vmax.xlane.f32.xlu0 %v870
        %v872 = vpop.xlane.xlu0 %871
        %v873 = vsub.f32 %v869, %v872
        %v874 = vmul.f32 %v873, 1.442695
        %v875 = vpow.pop %v874
        %v876 = vsel %vm840, %v875, 0.0
        %877 = vadd.xlane.f32.xlu0 %v876
        %v878 = vpop.xlane.xlu0 %877
        %v879 = vrcp.pop %v878
        %v880 = vmul.f32 %v875, %v879
        %881 = vrot.lane.b32.xlu0 %v831, 64
        %v882 = vpop.permute.xlu0 %881
        %v885 = vsel %vm840, %v880, 0
        %887 = vmatpush.msra.mxu0 0.0
        %888 = vmatpush.msra.mxu0 0.0
        %889 = vmatpush.msra.mxu0 0.0
        %890 = vmatpush.msra.mxu0 0.0
        %891 = vmatpush.msra.mxu0 0.0
        %892 = vmatpush.msra.mxu0 0.0
        %893 = vmatpush.msra.mxu0 0.0
        %894 = vmatpush.msra.mxu0 0.0
        %895 = vmatpush.msra.mxu0 0.0
        %896 = vmatpush.msra.mxu0 0.0
        %897 = vmatpush.msra.mxu0 0.0
        %898 = vmatpush.msra.mxu0 0.0
        %899 = vmatpush.msra.mxu0 0.0
        %900 = vmatpush.msra.mxu0 0.0
        %901 = vmatpush.msra.mxu0 0.0
        %902 = vmatpush.msra.mxu0 %v882
        %903 = vmatmul.f32.gmra.mxu0 %v885
        %v904 = vpop.f32.mrf.mxu0
        %v905 = vadd.f32 0.0, %v904
        %906 = vdwg.mxu0
        %907 = vrot.lane.b32.xlu0 %v831, 120
        %v908 = vpop.permute.xlu0 %907
        %909 = vrot.lane.b32.xlu0 %v831, 88
        %v910 = vpop.permute.xlu0 %909
        %v911 = vsel %vm840, %v908, 0
        %v913 = vsel %vm840, %v910, 0
        %915 = vmatpush.xpose.msra.mxu0 0.0
        %916 = vmatpush.xpose.msra.mxu0 0.0
        %917 = vmatpush.xpose.msra.mxu0 0.0
        %918 = vmatpush.xpose.msra.mxu0 0.0
        %919 = vmatpush.xpose.msra.mxu0 0.0
        %920 = vmatpush.xpose.msra.mxu0 0.0
        %921 = vmatpush.xpose.msra.mxu0 0.0
        %922 = vmatpush.xpose.msra.mxu0 0.0
        %923 = vmatpush.xpose.msra.mxu0 0.0
        %924 = vmatpush.xpose.msra.mxu0 0.0
        %925 = vmatpush.xpose.msra.mxu0 0.0
        %926 = vmatpush.xpose.msra.mxu0 0.0
        %927 = vmatpush.xpose.msra.mxu0 0.0
        %928 = vmatpush.xpose.msra.mxu0 0.0
        %929 = vmatpush.xpose.msra.mxu0 0.0
        %930 = vmatpush.xpose.msra.mxu0 %v913
        %931 = vmatmul.f32.gmra.mxu0 %v911
        %v932 = vpop.f32.mrf.mxu0
        %v933 = vadd.f32 0.0, %v932
        %934 = vdwg.mxu0
        %v935 = vmul.f32 %v933, 0.35355338
        %v936 = vadd.f32 %v935, %v867
        %v937 = vsel %vm840, %v936, -inf
        %938 = vmax.xlane.f32.xlu0 %v937
        %v939 = vpop.xlane.xlu0 %938
        %v940 = vsub.f32 %v936, %v939
        %v941 = vmul.f32 %v940, 1.442695
        %v942 = vpow.pop %v941
        %v943 = vsel %vm840, %v942, 0.0
        %944 = vadd.xlane.f32.xlu0 %v943
        %v945 = vpop.xlane.xlu0 %944
        %v946 = vrcp.pop %v945
        %v947 = vmul.f32 %v942, %v946
        %948 = vrot.lane.b32.xlu0 %v831, 56
        %v949 = vpop.permute.xlu0 %948
        %v952 = vsel %vm840, %v947, 0
        %954 = vmatpush.msra.mxu0 0.0
        %955 = vmatpush.msra.mxu0 0.0
        %956 = vmatpush.msra.mxu0 0.0
        %957 = vmatpush.msra.mxu0 0.0
        %958 = vmatpush.msra.mxu0 0.0
        %959 = vmatpush.msra.mxu0 0.0
        %960 = vmatpush.msra.mxu0 0.0
        %961 = vmatpush.msra.mxu0 0.0
        %962 = vmatpush.msra.mxu0 0.0
        %963 = vmatpush.msra.mxu0 0.0
        %964 = vmatpush.msra.mxu0 0.0
        %965 = vmatpush.msra.mxu0 0.0
        %966 = vmatpush.msra.mxu0 0.0
        %967 = vmatpush.msra.mxu0 0.0
        %968 = vmatpush.msra.mxu0 0.0
        %969 = vmatpush.msra.mxu0 %v949
        %970 = vmatmul.f32.gmra.mxu0 %v952
        %v971 = vpop.f32.mrf.mxu0
        %v972 = vadd.f32 0.0, %v971
        %973 = vdwg.mxu0
        %v975 = vsel %vm840, %v972, 0
        %977 = vmatpush.msra.mxu0 0.0
        %978 = vmatpush.msra.mxu0 0.0
        %979 = vmatpush.msra.mxu0 0.0
        %980 = vmatpush.msra.mxu0 0.0
        %981 = vmatpush.msra.mxu0 0.0
        %982 = vmatpush.msra.mxu0 0.0
        %983 = vmatpush.msra.mxu0 0.0
        %984 = vmatpush.msra.mxu0 0.0
        %985 = vmatpush.msra.mxu0 0.0
        %986 = vmatpush.msra.mxu0 0.0
        %987 = vmatpush.msra.mxu0 0.0
        %988 = vmatpush.msra.mxu0 0.0
        %989 = vmatpush.msra.mxu0 0.0
        %990 = vmatpush.msra.mxu0 0.0
        %991 = vmatpush.msra.mxu0 0.0
        %992 = vmatpush.msra.mxu0 %v834
        %993 = vmatmul.f32.gmra.mxu0 %v975
        %v994 = vpop.f32.mrf.mxu0
        %v995 = vadd.f32 0.0, %v994
        %996 = vdwg.mxu0
        %v998 = vsel %vm840, %v905, 0
        %1000 = vmatpush.msra.mxu0 0.0
        %1001 = vmatpush.msra.mxu0 0.0
        %1002 = vmatpush.msra.mxu0 0.0
        %1003 = vmatpush.msra.mxu0 0.0
        %1004 = vmatpush.msra.mxu0 0.0
        %1005 = vmatpush.msra.mxu0 0.0
        %1006 = vmatpush.msra.mxu0 0.0
        %1007 = vmatpush.msra.mxu0 0.0
        %1008 = vmatpush.msra.mxu0 0.0
        %1009 = vmatpush.msra.mxu0 0.0
        %1010 = vmatpush.msra.mxu0 0.0
        %1011 = vmatpush.msra.mxu0 0.0
        %1012 = vmatpush.msra.mxu0 0.0
        %1013 = vmatpush.msra.mxu0 0.0
        %1014 = vmatpush.msra.mxu0 0.0
        %1015 = vmatpush.msra.mxu0 %v833
        %1016 = vmatmul.f32.gmra.mxu0 %v998
        %v1017 = vpop.f32.mrf.mxu0
        %v1018 = vadd.f32 %v995, %v1017
        %1019 = vdwg.mxu0
        %1020 = vrot.lane.b32.xlu0 %v831, 112
        %v1021 = vpop.permute.xlu0 %1020
        %1022 = vrot.lane.b32.xlu0 %v831, 80
        %v1023 = vpop.permute.xlu0 %1022
        %v1024 = vsel %vm840, %v1021, 0
        %v1026 = vsel %vm840, %v1023, 0
        %1028 = vmatpush.xpose.msra.mxu0 0.0
        %1029 = vmatpush.xpose.msra.mxu0 0.0
        %1030 = vmatpush.xpose.msra.mxu0 0.0
        %1031 = vmatpush.xpose.msra.mxu0 0.0
        %1032 = vmatpush.xpose.msra.mxu0 0.0
        %1033 = vmatpush.xpose.msra.mxu0 0.0
        %1034 = vmatpush.xpose.msra.mxu0 0.0
        %1035 = vmatpush.xpose.msra.mxu0 0.0
        %1036 = vmatpush.xpose.msra.mxu0 0.0
        %1037 = vmatpush.xpose.msra.mxu0 0.0
        %1038 = vmatpush.xpose.msra.mxu0 0.0
        %1039 = vmatpush.xpose.msra.mxu0 0.0
        %1040 = vmatpush.xpose.msra.mxu0 0.0
        %1041 = vmatpush.xpose.msra.mxu0 0.0
        %1042 = vmatpush.xpose.msra.mxu0 0.0
        %1043 = vmatpush.xpose.msra.mxu0 %v1026
        %1044 = vmatmul.f32.gmra.mxu0 %v1024
        %v1045 = vpop.f32.mrf.mxu0
        %v1046 = vadd.f32 0.0, %v1045
        %1047 = vdwg.mxu0
        %v1048 = vmul.f32 %v1046, 0.35355338
        %v1049 = vadd.f32 %v1048, %v867
        %v1050 = vsel %vm840, %v1049, -inf
        %1051 = vmax.xlane.f32.xlu0 %v1050
        %v1052 = vpop.xlane.xlu0 %1051
        %v1053 = vsub.f32 %v1049, %v1052
        %v1054 = vmul.f32 %v1053, 1.442695
        %v1055 = vpow.pop %v1054
        %v1056 = vsel %vm840, %v1055, 0.0
        %1057 = vadd.xlane.f32.xlu0 %v1056
        %v1058 = vpop.xlane.xlu0 %1057
        %v1059 = vrcp.pop %v1058
        %v1060 = vmul.f32 %v1055, %v1059
        %1061 = vrot.lane.b32.xlu0 %v831, 48
        %v1062 = vpop.permute.xlu0 %1061
        %v1065 = vsel %vm840, %v1060, 0
        %1067 = vmatpush.msra.mxu0 0.0
        %1068 = vmatpush.msra.mxu0 0.0
        %1069 = vmatpush.msra.mxu0 0.0
        %1070 = vmatpush.msra.mxu0 0.0
        %1071 = vmatpush.msra.mxu0 0.0
        %1072 = vmatpush.msra.mxu0 0.0
        %1073 = vmatpush.msra.mxu0 0.0
        %1074 = vmatpush.msra.mxu0 0.0
        %1075 = vmatpush.msra.mxu0 0.0
        %1076 = vmatpush.msra.mxu0 0.0
        %1077 = vmatpush.msra.mxu0 0.0
        %1078 = vmatpush.msra.mxu0 0.0
        %1079 = vmatpush.msra.mxu0 0.0
        %1080 = vmatpush.msra.mxu0 0.0
        %1081 = vmatpush.msra.mxu0 0.0
        %1082 = vmatpush.msra.mxu0 %v1062
        %1083 = vmatmul.f32.gmra.mxu0 %v1065
        %v1084 = vpop.f32.mrf.mxu0
        %v1085 = vadd.f32 0.0, %v1084
        %1086 = vdwg.mxu0
        %v1088 = vsel %vm840, %v1085, 0
        %1090 = vmatpush.msra.mxu0 0.0
        %1091 = vmatpush.msra.mxu0 0.0
        %1092 = vmatpush.msra.mxu0 0.0
        %1093 = vmatpush.msra.mxu0 0.0
        %1094 = vmatpush.msra.mxu0 0.0
        %1095 = vmatpush.msra.mxu0 0.0
        %1096 = vmatpush.msra.mxu0 0.0
        %1097 = vmatpush.msra.mxu0 0.0
        %1098 = vmatpush.msra.mxu0 0.0
        %1099 = vmatpush.msra.mxu0 0.0
        %1100 = vmatpush.msra.mxu0 0.0
        %1101 = vmatpush.msra.mxu0 0.0
        %1102 = vmatpush.msra.mxu0 0.0
        %1103 = vmatpush.msra.mxu0 0.0
        %1104 = vmatpush.msra.mxu0 0.0
        %1105 = vmatpush.msra.mxu0 %v835
        %1106 = vmatmul.f32.gmra.mxu0 %v1088
        %v1107 = vpop.f32.mrf.mxu0
        %v1108 = vadd.f32 0.0, %v1107
        %1109 = vdwg.mxu0
        %v1110 = vadd.f32 %v1018, %v1108
        %1111 = vrot.lane.b32.xlu0 %v831, 104
        %v1112 = vpop.permute.xlu0 %1111
        %1113 = vrot.lane.b32.xlu0 %v831, 72
        %v1114 = vpop.permute.xlu0 %1113
        %v1115 = vsel %vm840, %v1112, 0
        %v1117 = vsel %vm840, %v1114, 0
        %1119 = vmatpush.xpose.msra.mxu0 0.0
        %1120 = vmatpush.xpose.msra.mxu0 0.0
        %1121 = vmatpush.xpose.msra.mxu0 0.0
        %1122 = vmatpush.xpose.msra.mxu0 0.0
        %1123 = vmatpush.xpose.msra.mxu0 0.0
        %1124 = vmatpush.xpose.msra.mxu0 0.0
        %1125 = vmatpush.xpose.msra.mxu0 0.0
        %1126 = vmatpush.xpose.msra.mxu0 0.0
        %1127 = vmatpush.xpose.msra.mxu0 0.0
        %1128 = vmatpush.xpose.msra.mxu0 0.0
        %1129 = vmatpush.xpose.msra.mxu0 0.0
        %1130 = vmatpush.xpose.msra.mxu0 0.0
        %1131 = vmatpush.xpose.msra.mxu0 0.0
        %1132 = vmatpush.xpose.msra.mxu0 0.0
        %1133 = vmatpush.xpose.msra.mxu0 0.0
        %1134 = vmatpush.xpose.msra.mxu0 %v1117
        %1135 = vmatmul.f32.gmra.mxu0 %v1115
        %v1136 = vpop.f32.mrf.mxu0
        %v1137 = vadd.f32 0.0, %v1136
        %1138 = vdwg.mxu0
        %v1139 = vmul.f32 %v1137, 0.35355338
        %v1140 = vadd.f32 %v1139, %v867
        %v1141 = vsel %vm840, %v1140, -inf
        %1142 = vmax.xlane.f32.xlu0 %v1141
        %v1143 = vpop.xlane.xlu0 %1142
        %v1144 = vsub.f32 %v1140, %v1143
        %v1145 = vmul.f32 %v1144, 1.442695
        %v1146 = vpow.pop %v1145
        %v1147 = vsel %vm840, %v1146, 0.0
        %1148 = vadd.xlane.f32.xlu0 %v1147
        %v1149 = vpop.xlane.xlu0 %1148
        %v1150 = vrcp.pop %v1149
        %v1151 = vmul.f32 %v1146, %v1150
        %1152 = vrot.lane.b32.xlu0 %v831, 40
        %v1153 = vpop.permute.xlu0 %1152
        %v1156 = vsel %vm840, %v1151, 0
        %1158 = vmatpush.msra.mxu0 0.0
        %1159 = vmatpush.msra.mxu0 0.0
        %1160 = vmatpush.msra.mxu0 0.0
        %1161 = vmatpush.msra.mxu0 0.0
        %1162 = vmatpush.msra.mxu0 0.0
        %1163 = vmatpush.msra.mxu0 0.0
        %1164 = vmatpush.msra.mxu0 0.0
        %1165 = vmatpush.msra.mxu0 0.0
        %1166 = vmatpush.msra.mxu0 0.0
        %1167 = vmatpush.msra.mxu0 0.0
        %1168 = vmatpush.msra.mxu0 0.0
        %1169 = vmatpush.msra.mxu0 0.0
        %1170 = vmatpush.msra.mxu0 0.0
        %1171 = vmatpush.msra.mxu0 0.0
        %1172 = vmatpush.msra.mxu0 0.0
        %1173 = vmatpush.msra.mxu0 %v1153
        %1174 = vmatmul.f32.gmra.mxu0 %v1156
        %v1175 = vpop.f32.mrf.mxu0
        %v1176 = vadd.f32 0.0, %v1175
        %1177 = vdwg.mxu0
        %v1179 = vsel %vm840, %v1176, 0
        %1181 = vmatpush.msra.mxu0 0.0
        %1182 = vmatpush.msra.mxu0 0.0
        %1183 = vmatpush.msra.mxu0 0.0
        %1184 = vmatpush.msra.mxu0 0.0
        %1185 = vmatpush.msra.mxu0 0.0
        %1186 = vmatpush.msra.mxu0 0.0
        %1187 = vmatpush.msra.mxu0 0.0
        %1188 = vmatpush.msra.mxu0 0.0
        %1189 = vmatpush.msra.mxu0 0.0
        %1190 = vmatpush.msra.mxu0 0.0
        %1191 = vmatpush.msra.mxu0 0.0
        %1192 = vmatpush.msra.mxu0 0.0
        %1193 = vmatpush.msra.mxu0 0.0
        %1194 = vmatpush.msra.mxu0 0.0
        %1195 = vmatpush.msra.mxu0 0.0
        %1196 = vmatpush.msra.mxu0 %v836
        %1197 = vmatmul.f32.gmra.mxu0 %v1179
        %v1198 = vpop.f32.mrf.mxu0
        %v1199 = vadd.f32 0.0, %v1198
        %1200 = vdwg.mxu0
        %v1201 = vadd.f32 %v1110, %v1199
        %v1202 = vld [vmem:[%s7] sm:$0x1]
        %v1204 = vperm.slane %v1202, 0
        %v1206 = vadd.f32 %v1201, %v1204
        %v1207 = vadd.f32 %v800, %v1206
        %v1208 = vld [vmem:[#allocation10] sm:$0x1]
        %v1209 = vld [vmem:[%s9] sm:$0x1]
        %v1210 = vsel %vm763, %v1207, 0.0
        %1211 = vadd.xlane.f32.xlu0 %v1210
        %v1212 = vpop.xlane.xlu0 %1211
        %v1213 = vmul.f32 %v1212, %v773
        %v1214 = vsub.f32 %v1207, %v1213
        %v1215 = vmul.f32 %v1214, %v1214
        %v1216 = vsel %vm763, %v1215, 0.0
        %1217 = vadd.xlane.f32.xlu0 %v1216
        %v1218 = vpop.xlane.xlu0 %1217
        %v1219 = vmul.f32 %v1218, %v773
        %v1220 = vadd.f32 %v1219, 1e-12
        %v1221 = vrsqrt.pop %v1220
        %v1222 = vmul.f32 %v1221, %v1220
        %v1223 = vmul.f32 %v1222, %v1221
        %v1224 = vmul.f32 0.5, %v1223
        %v1225 = vsub.f32 1.5, %v1224
        %v1226 = vmul.f32 %v1221, %v1225
        %vm1227 = vweird.f32 %v1220
        %vm1228 = vweird.f32 %v1221
        %vm1229 = vmor %vm1227, %vm1228
        %v1230 = vsel %vm1229, %v1221, %v1226
        %v1231 = vmul.f32 %v1214, %v1230
        %v1233 = vperm.slane %v1208, 0
        %v1235 = vmul.f32 %v1231, %v1233
        %v1237 = vperm.slane %v1209, 0
        %v1239 = vadd.f32 %v1235, %v1237
        %v1240 = vld [vmem:[%s10] sm:$0xff]
        %v1241 = vld [vmem:[%s10 + $0x8] sm:$0xff]
        %v1242 = vld [vmem:[%s10 + $0x10] sm:$0xff]
        %v1243 = vld [vmem:[%s10 + $0x18] sm:$0xff]
        %v1244 = vld [vmem:[%s11] sm:$0x1]
        %v1246 = vperm.slane %v1244, 0
        %v1249 = vsel %vm763, %v1239, 0
        %1251 = vmatpush.msra.mxu0 0.0
        %1252 = vmatpush.msra.mxu0 0.0
        %1253 = vmatpush.msra.mxu0 0.0
        %1254 = vmatpush.msra.mxu0 0.0
        %1255 = vmatpush.msra.mxu0 0.0
        %1256 = vmatpush.msra.mxu0 0.0
        %1257 = vmatpush.msra.mxu0 0.0
        %1258 = vmatpush.msra.mxu0 0.0
        %1259 = vmatpush.msra.mxu0 0.0
        %1260 = vmatpush.msra.mxu0 0.0
        %1261 = vmatpush.msra.mxu0 0.0
        %1262 = vmatpush.msra.mxu0 0.0
        %1263 = vmatpush.msra.mxu0 %v1243
        %1264 = vmatpush.msra.mxu0 %v1242
        %1265 = vmatpush.msra.mxu0 %v1241
        %1266 = vmatpush.msra.mxu0 %v1240
        %1267 = vmatmul.f32.gmra.mxu0 %v1249
        %v1268 = vpop.f32.mrf.mxu0
        %v1269 = vadd.f32 %v1246, %v1268
        %1270 = vdwg.mxu0
        %v1271 = vmul.f32 %v1269, 0.5
        %v1272 = vmul.f32 %v1269, 0.044715
        %v1273 = vmul.f32 %v1272, %v1269
        %v1274 = vmul.f32 %v1273, %v1269
        %v1275 = vadd.f32 %v1269, %v1274
        %v1276 = vmul.f32 %v1275, 0.7978846
        %v1277 = vtanh.pop %v1276
        %v1278 = vadd.f32 %v1277, 1.0
        %v1279 = vmul.f32 %v1271, %v1278
        %v1280 = vld [vmem:[%s12] sm:$0xff]
        %v1281 = vld [vmem:[%s12 + $0x8] sm:$0xff]
        %v1282 = vld [vmem:[%s12 + $0x10] sm:$0xff]
        %v1283 = vld [vmem:[%s12 + $0x18] sm:$0xff]
        %v1284 = vld [vmem:[%s12 + $0x20] sm:$0xff]
        %v1285 = vld [vmem:[%s12 + $0x28] sm:$0xff]
        %v1286 = vld [vmem:[%s12 + $0x30] sm:$0xff]
        %v1287 = vld [vmem:[%s12 + $0x38] sm:$0xff]
        %v1288 = vld [vmem:[%s13] sm:$0x1]
        %v1290 = vperm.slane %v1288, 0
        %vm1292 = vcmask 523264
        %v1294 = vsel %vm1292, %v1279, 0
        %1296 = vmatpush.msra.mxu0 0.0
        %1297 = vmatpush.msra.mxu0 0.0
        %1298 = vmatpush.msra.mxu0 0.0
        %1299 = vmatpush.msra.mxu0 0.0
        %1300 = vmatpush.msra.mxu0 0.0
        %1301 = vmatpush.msra.mxu0 0.0
        %1302 = vmatpush.msra.mxu0 0.0
        %1303 = vmatpush.msra.mxu0 0.0
        %1304 = vmatpush.msra.mxu0 %v1287
        %1305 = vmatpush.msra.mxu0 %v1286
        %1306 = vmatpush.msra.mxu0 %v1285
        %1307 = vmatpush.msra.mxu0 %v1284
        %1308 = vmatpush.msra.mxu0 %v1283
        %1309 = vmatpush.msra.mxu0 %v1282
        %1310 = vmatpush.msra.mxu0 %v1281
        %1311 = vmatpush.msra.mxu0 %v1280
        %1312 = vmatmul.f32.gmra.mxu0 %v1294
        %v1313 = vpop.f32.mrf.mxu0
        %v1314 = vadd.f32 %v1290, %v1313
        %1315 = vdwg.mxu0
        %v1316 = vadd.f32 %v1239, %v1314
        %v1317 = vld [vmem:[#allocation11] sm:$0x1]
        %v1318 = vld [vmem:[%s15] sm:$0x1]
        %v1319 = vsel %vm763, %v1316, 0.0
        %1320 = vadd.xlane.f32.xlu0 %v1319
        %v1321 = vpop.xlane.xlu0 %1320
        %v1322 = vmul.f32 %v1321, %v773
        %v1323 = vsub.f32 %v1316, %v1322
        %v1324 = vmul.f32 %v1323, %v1323
        %v1325 = vsel %vm763, %v1324, 0.0
        %1326 = vadd.xlane.f32.xlu0 %v1325
        %v1327 = vpop.xlane.xlu0 %1326
        %v1328 = vmul.f32 %v1327, %v773
        %v1329 = vadd.f32 %v1328, 1e-12
        %v1330 = vrsqrt.pop %v1329
        %v1331 = vmul.f32 %v1330, %v1329
        %v1332 = vmul.f32 %v1331, %v1330
        %v1333 = vmul.f32 0.5, %v1332
        %v1334 = vsub.f32 1.5, %v1333
        %v1335 = vmul.f32 %v1330, %v1334
        %vm1336 = vweird.f32 %v1329
        %vm1337 = vweird.f32 %v1330
        %vm1338 = vmor %vm1336, %vm1337
        %v1339 = vsel %vm1338, %v1330, %v1335
        %v1340 = vmul.f32 %v1323, %v1339
        %v1342 = vperm.slane %v1317, 0
        %v1344 = vmul.f32 %v1340, %v1342
        %v1346 = vperm.slane %v1318, 0
        %v1348 = vadd.f32 %v1344, %v1346
        %s1349 = scalar_lea.vmem %s4, 32
        %v1350 = vld [vmem:[%s1349] sm:$0xff]
        %v1351 = vld [vmem:[%s1349 + $0x8] sm:$0xff]
        %v1352 = vld [vmem:[%s1349 + $0x10] sm:$0xff]
        %v1353 = vld [vmem:[%s1349 + $0x18] sm:$0xff]
        %s1354 = scalar_lea.vmem %s5, 1
        %v1355 = vld [vmem:[%s1354] sm:$0x1]
        %v1357 = vperm.slane %v1355, 0
        %v1360 = vsel %vm763, %v1348, 0
        %1362 = vmatpush.msra.mxu0 0.0
        %1363 = vmatpush.msra.mxu0 0.0
        %1364 = vmatpush.msra.mxu0 0.0
        %1365 = vmatpush.msra.mxu0 0.0
        %1366 = vmatpush.msra.mxu0 0.0
        %1367 = vmatpush.msra.mxu0 0.0
        %1368 = vmatpush.msra.mxu0 0.0
        %1369 = vmatpush.msra.mxu0 0.0
        %1370 = vmatpush.msra.mxu0 0.0
        %1371 = vmatpush.msra.mxu0 0.0
        %1372 = vmatpush.msra.mxu0 0.0
        %1373 = vmatpush.msra.mxu0 0.0
        %1374 = vmatpush.msra.mxu0 %v1353
        %1375 = vmatpush.msra.mxu0 %v1352
        %1376 = vmatpush.msra.mxu0 %v1351
        %1377 = vmatpush.msra.mxu0 %v1350
        %1378 = vmatmul.f32.gmra.mxu0 %v1360
        %v1379 = vpop.f32.mrf.mxu0
        %v1380 = vadd.f32 %v1357, %v1379
        %1381 = vdwg.mxu0
        %s1382 = scalar_lea.vmem %s6, 32
        %v1383 = vld [vmem:[%s1382] sm:$0xff]
        %v1384 = vld [vmem:[%s1382 + $0x8] sm:$0xff]
        %v1385 = vld [vmem:[%s1382 + $0x10] sm:$0xff]
        %v1386 = vld [vmem:[%s1382 + $0x18] sm:$0xff]
        %1388 = vrot.lane.b32.xlu0 %v1380, 96
        %v1389 = vpop.permute.xlu0 %1388
        %v1390 = vsel %vm840, %v1380, 0
        %v1392 = vsel %vm840, %v1389, 0
        %1394 = vmatpush.xpose.msra.mxu0 0.0
        %1395 = vmatpush.xpose.msra.mxu0 0.0
        %1396 = vmatpush.xpose.msra.mxu0 0.0
        %1397 = vmatpush.xpose.msra.mxu0 0.0
        %1398 = vmatpush.xpose.msra.mxu0 0.0
        %1399 = vmatpush.xpose.msra.mxu0 0.0
        %1400 = vmatpush.xpose.msra.mxu0 0.0
        %1401 = vmatpush.xpose.msra.mxu0 0.0
        %1402 = vmatpush.xpose.msra.mxu0 0.0
        %1403 = vmatpush.xpose.msra.mxu0 0.0
        %1404 = vmatpush.xpose.msra.mxu0 0.0
        %1405 = vmatpush.xpose.msra.mxu0 0.0
        %1406 = vmatpush.xpose.msra.mxu0 0.0
        %1407 = vmatpush.xpose.msra.mxu0 0.0
        %1408 = vmatpush.xpose.msra.mxu0 0.0
        %1409 = vmatpush.xpose.msra.mxu0 %v1392
        %1410 = vmatmul.f32.gmra.mxu0 %v1390
        %v1411 = vpop.f32.mrf.mxu0
        %v1412 = vadd.f32 0.0, %v1411
        %1413 = vdwg.mxu0
        %v1414 = vmul.f32 %v1412, 0.35355338
        %v1415 = vadd.f32 %v1414, %v867
        %v1416 = vsel %vm840, %v1415, -inf
        %1417 = vmax.xlane.f32.xlu0 %v1416
        %v1418 = vpop.xlane.xlu0 %1417
        %v1419 = vsub.f32 %v1415, %v1418
        %v1420 = vmul.f32 %v1419, 1.442695
        %v1421 = vpow.pop %v1420
        %v1422 = vsel %vm840, %v1421, 0.0
        %1423 = vadd.xlane.f32.xlu0 %v1422
        %v1424 = vpop.xlane.xlu0 %1423
        %v1425 = vrcp.pop %v1424
        %v1426 = vmul.f32 %v1421, %v1425
        %1427 = vrot.lane.b32.xlu0 %v1380, 64
        %v1428 = vpop.permute.xlu0 %1427
        %v1431 = vsel %vm840, %v1426, 0
        %1433 = vmatpush.msra.mxu0 0.0
        %1434 = vmatpush.msra.mxu0 0.0
        %1435 = vmatpush.msra.mxu0 0.0
        %1436 = vmatpush.msra.mxu0 0.0
        %1437 = vmatpush.msra.mxu0 0.0
        %1438 = vmatpush.msra.mxu0 0.0
        %1439 = vmatpush.msra.mxu0 0.0
        %1440 = vmatpush.msra.mxu0 0.0
        %1441 = vmatpush.msra.mxu0 0.0
        %1442 = vmatpush.msra.mxu0 0.0
        %1443 = vmatpush.msra.mxu0 0.0
        %1444 = vmatpush.msra.mxu0 0.0
        %1445 = vmatpush.msra.mxu0 0.0
        %1446 = vmatpush.msra.mxu0 0.0
        %1447 = vmatpush.msra.mxu0 0.0
        %1448 = vmatpush.msra.mxu0 %v1428
        %1449 = vmatmul.f32.gmra.mxu0 %v1431
        %v1450 = vpop.f32.mrf.mxu0
        %v1451 = vadd.f32 0.0, %v1450
        %1452 = vdwg.mxu0
        %1453 = vrot.lane.b32.xlu0 %v1380, 120
        %v1454 = vpop.permute.xlu0 %1453
        %1455 = vrot.lane.b32.xlu0 %v1380, 88
        %v1456 = vpop.permute.xlu0 %1455
        %v1457 = vsel %vm840, %v1454, 0
        %v1459 = vsel %vm840, %v1456, 0
        %1461 = vmatpush.xpose.msra.mxu0 0.0
        %1462 = vmatpush.xpose.msra.mxu0 0.0
        %1463 = vmatpush.xpose.msra.mxu0 0.0
        %1464 = vmatpush.xpose.msra.mxu0 0.0
        %1465 = vmatpush.xpose.msra.mxu0 0.0
        %1466 = vmatpush.xpose.msra.mxu0 0.0
        %1467 = vmatpush.xpose.msra.mxu0 0.0
        %1468 = vmatpush.xpose.msra.mxu0 0.0
        %1469 = vmatpush.xpose.msra.mxu0 0.0
        %1470 = vmatpush.xpose.msra.mxu0 0.0
        %1471 = vmatpush.xpose.msra.mxu0 0.0
        %1472 = vmatpush.xpose.msra.mxu0 0.0
        %1473 = vmatpush.xpose.msra.mxu0 0.0
        %1474 = vmatpush.xpose.msra.mxu0 0.0
        %1475 = vmatpush.xpose.msra.mxu0 0.0
        %1476 = vmatpush.xpose.msra.mxu0 %v1459
        %1477 = vmatmul.f32.gmra.mxu0 %v1457
        %v1478 = vpop.f32.mrf.mxu0
        %v1479 = vadd.f32 0.0, %v1478
        %1480 = vdwg.mxu0
        %v1481 = vmul.f32 %v1479, 0.35355338
        %v1482 = vadd.f32 %v1481, %v867
        %v1483 = vsel %vm840, %v1482, -inf
        %1484 = vmax.xlane.f32.xlu0 %v1483
        %v1485 = vpop.xlane.xlu0 %1484
        %v1486 = vsub.f32 %v1482, %v1485
        %v1487 = vmul.f32 %v1486, 1.442695
        %v1488 = vpow.pop %v1487
        %v1489 = vsel %vm840, %v1488, 0.0
        %1490 = vadd.xlane.f32.xlu0 %v1489
        %v1491 = vpop.xlane.xlu0 %1490
        %v1492 = vrcp.pop %v1491
        %v1493 = vmul.f32 %v1488, %v1492
        %1494 = vrot.lane.b32.xlu0 %v1380, 56
        %v1495 = vpop.permute.xlu0 %1494
        %v1498 = vsel %vm840, %v1493, 0
        %1500 = vmatpush.msra.mxu0 0.0
        %1501 = vmatpush.msra.mxu0 0.0
        %1502 = vmatpush.msra.mxu0 0.0
        %1503 = vmatpush.msra.mxu0 0.0
        %1504 = vmatpush.msra.mxu0 0.0
        %1505 = vmatpush.msra.mxu0 0.0
        %1506 = vmatpush.msra.mxu0 0.0
        %1507 = vmatpush.msra.mxu0 0.0
        %1508 = vmatpush.msra.mxu0 0.0
        %1509 = vmatpush.msra.mxu0 0.0
        %1510 = vmatpush.msra.mxu0 0.0
        %1511 = vmatpush.msra.mxu0 0.0
        %1512 = vmatpush.msra.mxu0 0.0
        %1513 = vmatpush.msra.mxu0 0.0
        %1514 = vmatpush.msra.mxu0 0.0
        %1515 = vmatpush.msra.mxu0 %v1495
        %1516 = vmatmul.f32.gmra.mxu0 %v1498
        %v1517 = vpop.f32.mrf.mxu0
        %v1518 = vadd.f32 0.0, %v1517
        %1519 = vdwg.mxu0
        %v1521 = vsel %vm840, %v1518, 0
        %1523 = vmatpush.msra.mxu0 0.0
        %1524 = vmatpush.msra.mxu0 0.0
        %1525 = vmatpush.msra.mxu0 0.0
        %1526 = vmatpush.msra.mxu0 0.0
        %1527 = vmatpush.msra.mxu0 0.0
        %1528 = vmatpush.msra.mxu0 0.0
        %1529 = vmatpush.msra.mxu0 0.0
        %1530 = vmatpush.msra.mxu0 0.0
        %1531 = vmatpush.msra.mxu0 0.0
        %1532 = vmatpush.msra.mxu0 0.0
        %1533 = vmatpush.msra.mxu0 0.0
        %1534 = vmatpush.msra.mxu0 0.0
        %1535 = vmatpush.msra.mxu0 0.0
        %1536 = vmatpush.msra.mxu0 0.0
        %1537 = vmatpush.msra.mxu0 0.0
        %1538 = vmatpush.msra.mxu0 %v1384
        %1539 = vmatmul.f32.gmra.mxu0 %v1521
        %v1540 = vpop.f32.mrf.mxu0
        %v1541 = vadd.f32 0.0, %v1540
        %1542 = vdwg.mxu0
        %v1544 = vsel %vm840, %v1451, 0
        %1546 = vmatpush.msra.mxu0 0.0
        %1547 = vmatpush.msra.mxu0 0.0
        %1548 = vmatpush.msra.mxu0 0.0
        %1549 = vmatpush.msra.mxu0 0.0
        %1550 = vmatpush.msra.mxu0 0.0
        %1551 = vmatpush.msra.mxu0 0.0
        %1552 = vmatpush.msra.mxu0 0.0
        %1553 = vmatpush.msra.mxu0 0.0
        %1554 = vmatpush.msra.mxu0 0.0
        %1555 = vmatpush.msra.mxu0 0.0
        %1556 = vmatpush.msra.mxu0 0.0
        %1557 = vmatpush.msra.mxu0 0.0
        %1558 = vmatpush.msra.mxu0 0.0
        %1559 = vmatpush.msra.mxu0 0.0
        %1560 = vmatpush.msra.mxu0 0.0
        %1561 = vmatpush.msra.mxu0 %v1383
        %1562 = vmatmul.f32.gmra.mxu0 %v1544
        %v1563 = vpop.f32.mrf.mxu0
        %v1564 = vadd.f32 %v1541, %v1563
        %1565 = vdwg.mxu0
        %1566 = vrot.lane.b32.xlu0 %v1380, 112
        %v1567 = vpop.permute.xlu0 %1566
        %1568 = vrot.lane.b32.xlu0 %v1380, 80
        %v1569 = vpop.permute.xlu0 %1568
        %v1570 = vsel %vm840, %v1567, 0
        %v1572 = vsel %vm840, %v1569, 0
        %1574 = vmatpush.xpose.msra.mxu0 0.0
        %1575 = vmatpush.xpose.msra.mxu0 0.0
        %1576 = vmatpush.xpose.msra.mxu0 0.0
        %1577 = vmatpush.xpose.msra.mxu0 0.0
        %1578 = vmatpush.xpose.msra.mxu0 0.0
        %1579 = vmatpush.xpose.msra.mxu0 0.0
        %1580 = vmatpush.xpose.msra.mxu0 0.0
        %1581 = vmatpush.xpose.msra.mxu0 0.0
        %1582 = vmatpush.xpose.msra.mxu0 0.0
        %1583 = vmatpush.xpose.msra.mxu0 0.0
        %1584 = vmatpush.xpose.msra.mxu0 0.0
        %1585 = vmatpush.xpose.msra.mxu0 0.0
        %1586 = vmatpush.xpose.msra.mxu0 0.0
        %1587 = vmatpush.xpose.msra.mxu0 0.0
        %1588 = vmatpush.xpose.msra.mxu0 0.0
        %1589 = vmatpush.xpose.msra.mxu0 %v1572
        %1590 = vmatmul.f32.gmra.mxu0 %v1570
        %v1591 = vpop.f32.mrf.mxu0
        %v1592 = vadd.f32 0.0, %v1591
        %1593 = vdwg.mxu0
        %v1594 = vmul.f32 %v1592, 0.35355338
        %v1595 = vadd.f32 %v1594, %v867
        %v1596 = vsel %vm840, %v1595, -inf
        %1597 = vmax.xlane.f32.xlu0 %v1596
        %v1598 = vpop.xlane.xlu0 %1597
        %v1599 = vsub.f32 %v1595, %v1598
        %v1600 = vmul.f32 %v1599, 1.442695
        %v1601 = vpow.pop %v1600
        %v1602 = vsel %vm840, %v1601, 0.0
        %1603 = vadd.xlane.f32.xlu0 %v1602
        %v1604 = vpop.xlane.xlu0 %1603
        %v1605 = vrcp.pop %v1604
        %v1606 = vmul.f32 %v1601, %v1605
        %1607 = vrot.lane.b32.xlu0 %v1380, 48
        %v1608 = vpop.permute.xlu0 %1607
        %v1611 = vsel %vm840, %v1606, 0
        %1613 = vmatpush.msra.mxu0 0.0
        %1614 = vmatpush.msra.mxu0 0.0
        %1615 = vmatpush.msra.mxu0 0.0
        %1616 = vmatpush.msra.mxu0 0.0
        %1617 = vmatpush.msra.mxu0 0.0
        %1618 = vmatpush.msra.mxu0 0.0
        %1619 = vmatpush.msra.mxu0 0.0
        %1620 = vmatpush.msra.mxu0 0.0
        %1621 = vmatpush.msra.mxu0 0.0
        %1622 = vmatpush.msra.mxu0 0.0
        %1623 = vmatpush.msra.mxu0 0.0
        %1624 = vmatpush.msra.mxu0 0.0
        %1625 = vmatpush.msra.mxu0 0.0
        %1626 = vmatpush.msra.mxu0 0.0
        %1627 = vmatpush.msra.mxu0 0.0
        %1628 = vmatpush.msra.mxu0 %v1608
        %1629 = vmatmul.f32.gmra.mxu0 %v1611
        %v1630 = vpop.f32.mrf.mxu0
        %v1631 = vadd.f32 0.0, %v1630
        %1632 = vdwg.mxu0
        %v1634 = vsel %vm840, %v1631, 0
        %1636 = vmatpush.msra.mxu0 0.0
        %1637 = vmatpush.msra.mxu0 0.0
        %1638 = vmatpush.msra.mxu0 0.0
        %1639 = vmatpush.msra.mxu0 0.0
        %1640 = vmatpush.msra.mxu0 0.0
        %1641 = vmatpush.msra.mxu0 0.0
        %1642 = vmatpush.msra.mxu0 0.0
        %1643 = vmatpush.msra.mxu0 0.0
        %1644 = vmatpush.msra.mxu0 0.0
        %1645 = vmatpush.msra.mxu0 0.0
        %1646 = vmatpush.msra.mxu0 0.0
        %1647 = vmatpush.msra.mxu0 0.0
        %1648 = vmatpush.msra.mxu0 0.0
        %1649 = vmatpush.msra.mxu0 0.0
        %1650 = vmatpush.msra.mxu0 0.0
        %1651 = vmatpush.msra.mxu0 %v1385
        %1652 = vmatmul.f32.gmra.mxu0 %v1634
        %v1653 = vpop.f32.mrf.mxu0
        %v1654 = vadd.f32 0.0, %v1653
        %1655 = vdwg.mxu0
        %v1656 = vadd.f32 %v1564, %v1654
        %1657 = vrot.lane.b32.xlu0 %v1380, 104
        %v1658 = vpop.permute.xlu0 %1657
        %1659 = vrot.lane.b32.xlu0 %v1380, 72
        %v1660 = vpop.permute.xlu0 %1659
        %v1661 = vsel %vm840, %v1658, 0
        %v1663 = vsel %vm840, %v1660, 0
        %1665 = vmatpush.xpose.msra.mxu0 0.0
        %1666 = vmatpush.xpose.msra.mxu0 0.0
        %1667 = vmatpush.xpose.msra.mxu0 0.0
        %1668 = vmatpush.xpose.msra.mxu0 0.0
        %1669 = vmatpush.xpose.msra.mxu0 0.0
        %1670 = vmatpush.xpose.msra.mxu0 0.0
        %1671 = vmatpush.xpose.msra.mxu0 0.0
        %1672 = vmatpush.xpose.msra.mxu0 0.0
        %1673 = vmatpush.xpose.msra.mxu0 0.0
        %1674 = vmatpush.xpose.msra.mxu0 0.0
        %1675 = vmatpush.xpose.msra.mxu0 0.0
        %1676 = vmatpush.xpose.msra.mxu0 0.0
        %1677 = vmatpush.xpose.msra.mxu0 0.0
        %1678 = vmatpush.xpose.msra.mxu0 0.0
        %1679 = vmatpush.xpose.msra.mxu0 0.0
        %1680 = vmatpush.xpose.msra.mxu0 %v1663
        %1681 = vmatmul.f32.gmra.mxu0 %v1661
        %v1682 = vpop.f32.mrf.mxu0
        %v1683 = vadd.f32 0.0, %v1682
        %1684 = vdwg.mxu0
        %v1685 = vmul.f32 %v1683, 0.35355338
        %v1686 = vadd.f32 %v1685, %v867
        %v1687 = vsel %vm840, %v1686, -inf
        %1688 = vmax.xlane.f32.xlu0 %v1687
        %v1689 = vpop.xlane.xlu0 %1688
        %v1690 = vsub.f32 %v1686, %v1689
        %v1691 = vmul.f32 %v1690, 1.442695
        %v1692 = vpow.pop %v1691
        %v1693 = vsel %vm840, %v1692, 0.0
        %1694 = vadd.xlane.f32.xlu0 %v1693
        %v1695 = vpop.xlane.xlu0 %1694
        %v1696 = vrcp.pop %v1695
        %v1697 = vmul.f32 %v1692, %v1696
        %1698 = vrot.lane.b32.xlu0 %v1380, 40
        %v1699 = vpop.permute.xlu0 %1698
        %v1702 = vsel %vm840, %v1697, 0
        %1704 = vmatpush.msra.mxu0 0.0
        %1705 = vmatpush.msra.mxu0 0.0
        %1706 = vmatpush.msra.mxu0 0.0
        %1707 = vmatpush.msra.mxu0 0.0
        %1708 = vmatpush.msra.mxu0 0.0
        %1709 = vmatpush.msra.mxu0 0.0
        %1710 = vmatpush.msra.mxu0 0.0
        %1711 = vmatpush.msra.mxu0 0.0
        %1712 = vmatpush.msra.mxu0 0.0
        %1713 = vmatpush.msra.mxu0 0.0
        %1714 = vmatpush.msra.mxu0 0.0
        %1715 = vmatpush.msra.mxu0 0.0
        %1716 = vmatpush.msra.mxu0 0.0
        %1717 = vmatpush.msra.mxu0 0.0
        %1718 = vmatpush.msra.mxu0 0.0
        %1719 = vmatpush.msra.mxu0 %v1699
        %1720 = vmatmul.f32.gmra.mxu0 %v1702
        %v1721 = vpop.f32.mrf.mxu0
        %v1722 = vadd.f32 0.0, %v1721
        %1723 = vdwg.mxu0
        %v1725 = vsel %vm840, %v1722, 0
        %1727 = vmatpush.msra.mxu0 0.0
        %1728 = vmatpush.msra.mxu0 0.0
        %1729 = vmatpush.msra.mxu0 0.0
        %1730 = vmatpush.msra.mxu0 0.0
        %1731 = vmatpush.msra.mxu0 0.0
        %1732 = vmatpush.msra.mxu0 0.0
        %1733 = vmatpush.msra.mxu0 0.0
        %1734 = vmatpush.msra.mxu0 0.0
        %1735 = vmatpush.msra.mxu0 0.0
        %1736 = vmatpush.msra.mxu0 0.0
        %1737 = vmatpush.msra.mxu0 0.0
        %1738 = vmatpush.msra.mxu0 0.0
        %1739 = vmatpush.msra.mxu0 0.0
        %1740 = vmatpush.msra.mxu0 0.0
        %1741 = vmatpush.msra.mxu0 0.0
        %1742 = vmatpush.msra.mxu0 %v1386
        %1743 = vmatmul.f32.gmra.mxu0 %v1725
        %v1744 = vpop.f32.mrf.mxu0
        %v1745 = vadd.f32 0.0, %v1744
        %1746 = vdwg.mxu0
        %v1747 = vadd.f32 %v1656, %v1745
        %s1748 = scalar_lea.vmem %s7, 1
        %v1749 = vld [vmem:[%s1748] sm:$0x1]
        %v1751 = vperm.slane %v1749, 0
        %v1753 = vadd.f32 %v1747, %v1751
        %v1754 = vadd.f32 %v1348, %v1753
        %s1755 = scalar_lea.vmem [#allocation10], 1
        %v1756 = vld [vmem:[%s1755] sm:$0x1]
        %s1757 = scalar_lea.vmem %s9, 1
        %v1758 = vld [vmem:[%s1757] sm:$0x1]
        %v1759 = vsel %vm763, %v1754, 0.0
        %1760 = vadd.xlane.f32.xlu0 %v1759
        %v1761 = vpop.xlane.xlu0 %1760
        %v1762 = vmul.f32 %v1761, %v773
        %v1763 = vsub.f32 %v1754, %v1762
        %v1764 = vmul.f32 %v1763, %v1763
        %v1765 = vsel %vm763, %v1764, 0.0
        %1766 = vadd.xlane.f32.xlu0 %v1765
        %v1767 = vpop.xlane.xlu0 %1766
        %v1768 = vmul.f32 %v1767, %v773
        %v1769 = vadd.f32 %v1768, 1e-12
        %v1770 = vrsqrt.pop %v1769
        %v1771 = vmul.f32 %v1770, %v1769
        %v1772 = vmul.f32 %v1771, %v1770
        %v1773 = vmul.f32 0.5, %v1772
        %v1774 = vsub.f32 1.5, %v1773
        %v1775 = vmul.f32 %v1770, %v1774
        %vm1776 = vweird.f32 %v1769
        %vm1777 = vweird.f32 %v1770
        %vm1778 = vmor %vm1776, %vm1777
        %v1779 = vsel %vm1778, %v1770, %v1775
        %v1780 = vmul.f32 %v1763, %v1779
        %v1782 = vperm.slane %v1756, 0
        %v1784 = vmul.f32 %v1780, %v1782
        %v1786 = vperm.slane %v1758, 0
        %v1788 = vadd.f32 %v1784, %v1786
        %s1789 = scalar_lea.vmem %s10, 32
        %v1790 = vld [vmem:[%s1789] sm:$0xff]
        %v1791 = vld [vmem:[%s1789 + $0x8] sm:$0xff]
        %v1792 = vld [vmem:[%s1789 + $0x10] sm:$0xff]
        %v1793 = vld [vmem:[%s1789 + $0x18] sm:$0xff]
        %s1794 = scalar_lea.vmem %s11, 1
        %v1795 = vld [vmem:[%s1794] sm:$0x1]
        %v1797 = vperm.slane %v1795, 0
        %v1800 = vsel %vm763, %v1788, 0
        %1802 = vmatpush.msra.mxu0 0.0
        %1803 = vmatpush.msra.mxu0 0.0
        %1804 = vmatpush.msra.mxu0 0.0
        %1805 = vmatpush.msra.mxu0 0.0
        %1806 = vmatpush.msra.mxu0 0.0
        %1807 = vmatpush.msra.mxu0 0.0
        %1808 = vmatpush.msra.mxu0 0.0
        %1809 = vmatpush.msra.mxu0 0.0
        %1810 = vmatpush.msra.mxu0 0.0
        %1811 = vmatpush.msra.mxu0 0.0
        %1812 = vmatpush.msra.mxu0 0.0
        %1813 = vmatpush.msra.mxu0 0.0
        %1814 = vmatpush.msra.mxu0 %v1793
        %1815 = vmatpush.msra.mxu0 %v1792
        %1816 = vmatpush.msra.mxu0 %v1791
        %1817 = vmatpush.msra.mxu0 %v1790
        %1818 = vmatmul.f32.gmra.mxu0 %v1800
        %v1819 = vpop.f32.mrf.mxu0
        %v1820 = vadd.f32 %v1797, %v1819
        %1821 = vdwg.mxu0
        %v1822 = vmul.f32 %v1820, 0.5
        %v1823 = vmul.f32 %v1820, 0.044715
        %v1824 = vmul.f32 %v1823, %v1820
        %v1825 = vmul.f32 %v1824, %v1820
        %v1826 = vadd.f32 %v1820, %v1825
        %v1827 = vmul.f32 %v1826, 0.7978846
        %v1828 = vtanh.pop %v1827
        %v1829 = vadd.f32 %v1828, 1.0
        %v1830 = vmul.f32 %v1822, %v1829
        %s1831 = scalar_lea.vmem %s12, 64
        %v1832 = vld [vmem:[%s1831] sm:$0xff]
        %v1833 = vld [vmem:[%s1831 + $0x8] sm:$0xff]
        %v1834 = vld [vmem:[%s1831 + $0x10] sm:$0xff]
        %v1835 = vld [vmem:[%s1831 + $0x18] sm:$0xff]
        %v1836 = vld [vmem:[%s1831 + $0x20] sm:$0xff]
        %v1837 = vld [vmem:[%s1831 + $0x28] sm:$0xff]
        %v1838 = vld [vmem:[%s1831 + $0x30] sm:$0xff]
        %v1839 = vld [vmem:[%s1831 + $0x38] sm:$0xff]
        %s1840 = scalar_lea.vmem %s13, 1
        %v1841 = vld [vmem:[%s1840] sm:$0x1]
        %v1843 = vperm.slane %v1841, 0
        %v1846 = vsel %vm1292, %v1830, 0
        %1848 = vmatpush.msra.mxu0 0.0
        %1849 = vmatpush.msra.mxu0 0.0
        %1850 = vmatpush.msra.mxu0 0.0
        %1851 = vmatpush.msra.mxu0 0.0
        %1852 = vmatpush.msra.mxu0 0.0
        %1853 = vmatpush.msra.mxu0 0.0
        %1854 = vmatpush.msra.mxu0 0.0
        %1855 = vmatpush.msra.mxu0 0.0
        %1856 = vmatpush.msra.mxu0 %v1839
        %1857 = vmatpush.msra.mxu0 %v1838
        %1858 = vmatpush.msra.mxu0 %v1837
        %1859 = vmatpush.msra.mxu0 %v1836
        %1860 = vmatpush.msra.mxu0 %v1835
        %1861 = vmatpush.msra.mxu0 %v1834
        %1862 = vmatpush.msra.mxu0 %v1833
        %1863 = vmatpush.msra.mxu0 %v1832
        %1864 = vmatmul.f32.gmra.mxu0 %v1846
        %v1865 = vpop.f32.mrf.mxu0
        %v1866 = vadd.f32 %v1843, %v1865
        %1867 = vdwg.mxu0
        %v1868 = vadd.f32 %v1788, %v1866
        %s1869 = scalar_lea.vmem [#allocation11], 1
        %v1870 = vld [vmem:[%s1869] sm:$0x1]
        %s1871 = scalar_lea.vmem %s15, 1
        %v1872 = vld [vmem:[%s1871] sm:$0x1]
        %v1873 = vsel %vm763, %v1868, 0.0
        %1874 = vadd.xlane.f32.xlu0 %v1873
        %v1875 = vpop.xlane.xlu0 %1874
        %v1876 = vmul.f32 %v1875, %v773
        %v1877 = vsub.f32 %v1868, %v1876
        %v1878 = vmul.f32 %v1877, %v1877
        %v1879 = vsel %vm763, %v1878, 0.0
        %1880 = vadd.xlane.f32.xlu0 %v1879
        %v1881 = vpop.xlane.xlu0 %1880
        %v1882 = vmul.f32 %v1881, %v773
        %v1883 = vadd.f32 %v1882, 1e-12
        %v1884 = vrsqrt.pop %v1883
        %v1885 = vmul.f32 %v1884, %v1883
        %v1886 = vmul.f32 %v1885, %v1884
        %v1887 = vmul.f32 0.5, %v1886
        %v1888 = vsub.f32 1.5, %v1887
        %v1889 = vmul.f32 %v1884, %v1888
        %vm1890 = vweird.f32 %v1883
        %vm1891 = vweird.f32 %v1884
        %vm1892 = vmor %vm1890, %vm1891
        %v1893 = vsel %vm1892, %v1884, %v1889
        %v1894 = vmul.f32 %v1877, %v1893
        %v1896 = vperm.slane %v1870, 0
        %v1898 = vmul.f32 %v1894, %v1896
        %v1900 = vperm.slane %v1872, 0
        %v1902 = vadd.f32 %v1898, %v1900
        %v1903 = vld [vmem:[%s16] sm:$0x1]
        %v1904 = vld [vmem:[%s17] sm:$0x1]
        %v1905 = vsel %vm763, %v1902, 0.0
        %1906 = vadd.xlane.f32.xlu0 %v1905
        %v1907 = vpop.xlane.xlu0 %1906
        %v1908 = vmul.f32 %v1907, %v773
        %v1909 = vsub.f32 %v1902, %v1908
        %v1910 = vmul.f32 %v1909, %v1909
        %v1911 = vsel %vm763, %v1910, 0.0
        %1912 = vadd.xlane.f32.xlu0 %v1911
        %v1913 = vpop.xlane.xlu0 %1912
        %v1914 = vmul.f32 %v1913, %v773
        %v1915 = vadd.f32 %v1914, 1e-05
        %v1916 = vrsqrt.pop %v1915
        %v1917 = vmul.f32 %v1916, %v1915
        %v1918 = vmul.f32 %v1917, %v1916
        %v1919 = vmul.f32 0.5, %v1918
        %v1920 = vsub.f32 1.5, %v1919
        %v1921 = vmul.f32 %v1916, %v1920
        %vm1922 = vweird.f32 %v1915
        %vm1923 = vweird.f32 %v1916
        %vm1924 = vmor %vm1922, %vm1923
        %v1925 = vsel %vm1924, %v1916, %v1921
        %v1926 = vmul.f32 %v1909, %v1925
        %v1928 = vperm.slane %v1903, 0
        %v1930 = vmul.f32 %v1926, %v1928
        %v1932 = vperm.slane %v1904, 0
        %v1934 = vadd.f32 %v1930, %v1932
        %v1935 = vld [vmem:[#allocation13] sm:$0xff]
        %v1936 = vld [vmem:[#allocation13 + $0x8] sm:$0xff]
        %v1937 = vld [vmem:[#allocation13 + $0x10] sm:$0xff]
        %v1938 = vld [vmem:[#allocation13 + $0x18] sm:$0xff]
        %v1939 = vld [vmem:[%s19] sm:$0x1]
        %v1941 = vperm.slane %v1939, 0
        %v1944 = vsel %vm763, %v1934, 0
        %1946 = vmatpush.msra.mxu0 0.0
        %1947 = vmatpush.msra.mxu0 0.0
        %1948 = vmatpush.msra.mxu0 0.0
        %1949 = vmatpush.msra.mxu0 0.0
        %1950 = vmatpush.msra.mxu0 0.0
        %1951 = vmatpush.msra.mxu0 0.0
        %1952 = vmatpush.msra.mxu0 0.0
        %1953 = vmatpush.msra.mxu0 0.0
        %1954 = vmatpush.msra.mxu0 0.0
        %1955 = vmatpush.msra.mxu0 0.0
        %1956 = vmatpush.msra.mxu0 0.0
        %1957 = vmatpush.msra.mxu0 0.0
        %1958 = vmatpush.msra.mxu0 %v1938
        %1959 = vmatpush.msra.mxu0 %v1937
        %1960 = vmatpush.msra.mxu0 %v1936
        %1961 = vmatpush.msra.mxu0 %v1935
        %1962 = vmatmul.f32.gmra.mxu0 %v1944
        %v1963 = vpop.f32.mrf.mxu0
        %v1964 = vadd.f32 %v1941, %v1963
        %1965 = vdwg.mxu0
        %1966 = vst [vmem:[%s759] sm:$0xff] %v1964
        %s1967 = sand.u32 %s480, 1
        %s1968 = scalar_lea.sflag [#allocation4], %s1967
        %s1969 = sand.u32 %s480, 1
        %s1970 = smul.addr %s1969, 8
        %s1971 = scalar_lea.vmem [#allocation14], %s1970
        // Predicated region
        $region129: #{tpu_custom_call.1} parent=99 // pred_check
          %p1972 = pneg %p490
        $region130: #{tpu_custom_call.1} parent=99 // pred_check_branch
          %1974 = sbr.rel (%p1972) target = $region132
        $region131: #{tpu_custom_call.1} parent=99 // pred_region
          %1976 = vsyncadd %s1968, 0
          %s1977 = smul.addr %s42, 8
          %s1978 = scalar_lea.hbm %s20, %s1977
          %s1980 = sshll.u32 %s1971, 4
          %s1981 = int_to_ptr.vmem [resolvable:$true] %s1980
          %s1982 = sshll.u32 %s1978, 4
          %s1983 = int_to_ptr.hbm [resolvable:$true] %s1982
          %1985 = dma.vmem_to_hbm [thread:$0]  %s1981, 128, %s1983, %s1968
        $region132: #{tpu_custom_call.1} parent=99 // pred_fallthru
          _
      $region100: #{tpu_custom_call.1} parent=5 // pred_fallthru
        _
      %p1986 = scmp.le.s32.totalorder 2, %s37
      // Predicated region
      $region133: #{tpu_custom_call.1} parent=5 // pred_check
        %p1987 = pneg %p1986
      $region134: #{tpu_custom_call.1} parent=5 // pred_check_branch
        %1989 = sbr.rel (%p1987) target = $region136
      $region135: #{tpu_custom_call.1} parent=5 // pred_region
        %s1990 = ssub.s32 %s37, 2
        // Predicated region
        $region137: #{tpu_custom_call.1} parent=135 // pred_check
          %p1991 = pneg %p496
        $region138: #{tpu_custom_call.1} parent=135 // pred_check_branch
          %1993 = sbr.rel (%p1991) target = $region140
        $region139: #{tpu_custom_call.1} parent=135 // pred_region
          %s1994 = sand.u32 %s481, 1
          %s1995 = scalar_lea.sflag [#allocation4], %s1994
          %s1996 = sand.u32 %s481, 1
          %s1997 = smul.addr %s1996, 8
          %s1998 = scalar_lea.vmem [#allocation14], %s1997
          %2000 = dma.done %s1995, 128
        $region140: #{tpu_custom_call.1} parent=135 // pred_fallthru
          _
      $region136: #{tpu_custom_call.1} parent=5 // pred_fallthru
        _
    $region6: #{tpu_custom_call.1} parent=1 // loop_footer
      %s41 = sadd.s32 1, %s37
    $region7: #{tpu_custom_call.1} parent=1 // loop_footer_branch
      %36 = sbr.rel target = $region3
    $region8: #{tpu_custom_call.1} parent=1 // loop_exit
      _
    %2001 = vsyncpa [#allocation3], 1
    %s2002 = scalar_lea.sflag [#allocation3], 1
    %2003 = vsyncpa %s2002, 1
    %2004 = vsyncpa [#allocation6], 1
    %s2005 = scalar_lea.sflag [#allocation6], 1
    %2006 = vsyncpa %s2005, 1
    %2007 = vsyncpa [#allocation9], 1
    %2008 = vsyncpa [#allocation12], 1
    %2009 = vsyncpa [#allocation4], 1
    %s2010 = scalar_lea.sflag [#allocation4], 1
    %2011 = vsyncpa %s2010, 1

</llo_original>
